<compile_context>
chip_gen: v7x
topology: tpu7x:2x2x1
jax: 0.10.0
libtpu: 0.0.40
codegen_flags: <defaults>
</compile_context>

<pallas_src>
import functools
import math

import jax
import jax.numpy as jnp
from jax.experimental import pallas as pl
from jax.experimental.pallas import tpu as pltpu


def _layer_norm(h, gamma, beta, eps=1e-5):
    mu = jnp.mean(h, axis=-1, keepdims=True)
    var = jnp.mean((h - mu) ** 2, axis=-1, keepdims=True)
    return (h - mu) * jax.lax.rsqrt(var + eps) * gamma + beta


def _gelu(x):
    # tanh-approximation GELU (GPT-style feed-forward nonlinearity)
    c = math.sqrt(2.0 / math.pi)
    return 0.5 * x * (1.0 + jnp.tanh(c * (x + 0.044715 * x * x * x)))


def gpt_layer_kernel(
    x_q_ref, x_full_ref,
    wq_ref, bq_ref, wk_ref, bk_ref, wv_ref, bv_ref, wo_ref, bo_ref,
    w1_ref, b1_ref, w2_ref, b2_ref,
    g1_ref, be1_ref, g2_ref, be2_ref,
    out_ref, k_out_ref, v_out_ref,
    *, num_heads, q_tile,
):
    H = num_heads
    tq = q_tile
    qi = pl.program_id(1)

    # ---- hoisted single reads of activations / parameters -------------------
    x_res = x_q_ref[0].astype(jnp.float32)          # (tq, D)  residual path, f32
    x_full = x_full_ref[0].astype(jnp.bfloat16)     # (S, D)   K/V source, bf16
    x_q = x_res.astype(jnp.bfloat16)                # (tq, D)  MXU operand, bf16

    S, D = x_full.shape
    Dh = D // H
    scale = 1.0 / math.sqrt(Dh)

    bq = bq_ref[...]; bk = bk_ref[...]; bv = bv_ref[...]; bo = bo_ref[...]
    b1 = b1_ref[...]; b2 = b2_ref[...]
    g1 = g1_ref[...]; be1 = be1_ref[...]
    g2 = g2_ref[...]; be2 = be2_ref[...]
    wo = wo_ref[...]                                # (D, D) bf16, sliced per head

    # ---- QKV projections: full-width bf16 MXU matmuls, f32 accumulation -----
    q = jnp.dot(x_q, wq_ref[...], preferred_element_type=jnp.float32) + bq      # (tq, D)
    k = jnp.dot(x_full, wk_ref[...], preferred_element_type=jnp.float32) + bk   # (S, D)
    v = jnp.dot(x_full, wv_ref[...], preferred_element_type=jnp.float32) + bv   # (S, D)

    q_bf = q.astype(jnp.bfloat16)
    k_bf = k.astype(jnp.bfloat16)
    v_bf = v.astype(jnp.bfloat16)

    # K/V rows belonging to this query tile (for the cache output).
    if tq == S:                                     # static branch: no recompute
        k_tile, v_tile = k, v
    else:
        k_tile = jnp.dot(x_q, wk_ref[...], preferred_element_type=jnp.float32) + bk
        v_tile = jnp.dot(x_q, wv_ref[...], preferred_element_type=jnp.float32) + bv

    # ---- causal mask generated in-kernel (no (B,S,S) mask DMA) --------------
    row = qi * tq + jax.lax.broadcasted_iota(jnp.int32, (tq, S), 0)
    col = jax.lax.broadcasted_iota(jnp.int32, (tq, S), 1)
    causal = row >= col                             # (tq, S) bool, shared by heads

    # ---- multi-head attention (bf16 MXU operands, f32 softmax) --------------
    m = jnp.zeros((tq, D), jnp.float32)
    for h in range(H):                              # static unroll, H is small
        sl = slice(h * Dh, (h + 1) * Dh)
        # scores: contract the Dh axis of both operands (no materialized k.T)
        s = jax.lax.dot_general(
            q_bf[:, sl], k_bf[:, sl],
            (((1,), (1,)), ((), ())),
            preferred_element_type=jnp.float32) * scale          # (tq, S) f32
        s = jnp.where(causal, s, -1e9)
        s = s - jnp.max(s, axis=-1, keepdims=True)
        p = jnp.exp(s)
        p = p * pl.reciprocal(jnp.sum(p, axis=-1, keepdims=True), approx=True)
        o_h = jnp.dot(p.astype(jnp.bfloat16), v_bf[:, sl],
                      preferred_element_type=jnp.float32)        # (tq, Dh)
        # fold the output projection per head: no concat of head outputs
        m = m + jnp.dot(o_h.astype(jnp.bfloat16), wo[sl, :],
                        preferred_element_type=jnp.float32)      # (tq, D)
        # K/V cache written directly in final (B, H, S, Dh) layout
        k_out_ref[0, h] = k_tile[:, sl].astype(k_out_ref.dtype)
        v_out_ref[0, h] = v_tile[:, sl].astype(v_out_ref.dtype)
    m = m + bo

    # ---- residual + LayerNorm 1 (dropout = identity, eval mode) -------------
    h1 = _layer_norm(x_res + m, g1, be1)

    # ---- position-wise feed-forward (bf16 matmuls, f32 GELU) ----------------
    f = jnp.dot(h1.astype(jnp.bfloat16), w1_ref[...],
                preferred_element_type=jnp.float32) + b1
    f = _gelu(f)
    f = jnp.dot(f.astype(jnp.bfloat16), w2_ref[...],
                preferred_element_type=jnp.float32) + b2

    # ---- residual + LayerNorm 2 ----------------------------------------------
    out_ref[0] = _layer_norm(h1 + f, g2, be2).astype(out_ref.dtype)


def init_params(key, d_model, d_ff, num_heads):
    del num_heads
    ks = jax.random.split(key, 8)

    def lin(k, fan_in, fan_out):
        lim = 1.0 / math.sqrt(fan_in)
        return jax.random.uniform(k, (fan_in, fan_out), jnp.float32, -lim, lim)

    return dict(
        wq=lin(ks[0], d_model, d_model), bq=jnp.zeros((1, d_model), jnp.float32),
        wk=lin(ks[1], d_model, d_model), bk=jnp.zeros((1, d_model), jnp.float32),
        wv=lin(ks[2], d_model, d_model), bv=jnp.zeros((1, d_model), jnp.float32),
        wo=lin(ks[3], d_model, d_model), bo=jnp.zeros((1, d_model), jnp.float32),
        w1=lin(ks[4], d_model, d_ff),    b1=jnp.zeros((1, d_ff), jnp.float32),
        w2=lin(ks[5], d_ff, d_model),    b2=jnp.zeros((1, d_model), jnp.float32),
        g1=jnp.ones((1, d_model), jnp.float32), be1=jnp.zeros((1, d_model), jnp.float32),
        g2=jnp.ones((1, d_model), jnp.float32), be2=jnp.zeros((1, d_model), jnp.float32),
    )


@functools.partial(jax.jit, static_argnames=("num_heads", "q_tile"))
def gpt_layer(x, params, *, num_heads, q_tile=None):
    B, S, D = x.shape
    d_ff = params["w1"].shape[1]
    H = num_heads
    assert D % H == 0
    Dh = D // H

    # Query-tile size: bounds the per-step live set ((tq,S) scores per head) so
    # the fused layer keeps fitting VMEM at long S (v7x: 64 MiB).
    if q_tile is None:
        q_tile = S if S <= 256 else 256
    tq = q_tile
    assert S % tq == 0 and (tq == S or tq % 8 == 0)
    n_q = S // tq

    # bf16 weights: half the HBM->VMEM DMA and native MXU operand dtype.
    bf = jnp.bfloat16
    wq = params["wq"].astype(bf); wk = params["wk"].astype(bf)
    wv = params["wv"].astype(bf); wo = params["wo"].astype(bf)
    w1 = params["w1"].astype(bf); w2 = params["w2"].astype(bf)

    full = lambda shape: pl.BlockSpec(shape, lambda b, qi: (0, 0))
    in_specs = [
        pl.BlockSpec((1, tq, D), lambda b, qi: (b, qi, 0)),   # x (query tile)
        pl.BlockSpec((1, S, D), lambda b, qi: (b, 0, 0)),     # x (full seq, for K/V)
        full((D, D)), full((1, D)),                           # wq, bq
        full((D, D)), full((1, D)),                           # wk, bk
        full((D, D)), full((1, D)),                           # wv, bv
        full((D, D)), full((1, D)),                           # wo, bo
        full((D, d_ff)), full((1, d_ff)),                     # w1, b1
        full((d_ff, D)), full((1, D)),                        # w2, b2
        full((1, D)), full((1, D)),                           # ln1 gamma, beta
        full((1, D)), full((1, D)),                           # ln2 gamma, beta
    ]
    out_specs = (
        pl.BlockSpec((1, tq, D), lambda b, qi: (b, qi, 0)),           # out
        pl.BlockSpec((1, H, tq, Dh), lambda b, qi: (b, 0, qi, 0)),    # K cache
        pl.BlockSpec((1, H, tq, Dh), lambda b, qi: (b, 0, qi, 0)),    # V cache
    )
    out_shape = (
        jax.ShapeDtypeStruct((B, S, D), x.dtype),
        jax.ShapeDtypeStruct((B, H, S, Dh), x.dtype),
        jax.ShapeDtypeStruct((B, H, S, Dh), x.dtype),
    )

    # Explicit VMEM budget (resident bf16 weights + pipelined activation tiles).
    weight_bytes = 2 * (4 * D * D + 2 * D * d_ff)
    act_bytes = 4 * (4 * S * D + 6 * tq * D + 2 * tq * S + 2 * tq * d_ff)
    vmem_limit = int(min(100 * 2**20, max(32 * 2**20, 2 * weight_bytes + 3 * act_bytes)))

    out, K, V = pl.pallas_call(
        functools.partial(gpt_layer_kernel, num_heads=H, q_tile=tq),
        out_shape=out_shape,
        grid=(B, n_q),
        in_specs=in_specs,
        out_specs=out_specs,
        compiler_params=pltpu.CompilerParams(
            dimension_semantics=("parallel", "parallel"),
            vmem_limit_bytes=vmem_limit,
        ),
    )(
        x, x,
        wq, params["bq"], wk, params["bk"], wv, params["bv"], wo, params["bo"],
        w1, params["b1"], w2, params["b2"],
        params["g1"], params["be1"], params["g2"], params["be2"],
    )
    return out, (K, V)


def gpt_layer_reference(x, params, num_heads):
    """Pure-JAX f32 reference (causal mask, eval mode, past=None)."""
    B, S, D = x.shape
    H = num_heads
    Dh = D // H
    q = x @ params["wq"] + params["bq"]
    k = x @ params["wk"] + params["bk"]
    v = x @ params["wv"] + params["bv"]
    qh = q.reshape(B, S, H, Dh).transpose(0, 2, 1, 3)
    kh = k.reshape(B, S, H, Dh).transpose(0, 2, 1, 3)
    vh = v.reshape(B, S, H, Dh).transpose(0, 2, 1, 3)
    s = jnp.einsum("bhqd,bhkd->bhqk", qh, kh) / math.sqrt(Dh)
    causal = jnp.tril(jnp.ones((S, S), dtype=bool))
    s = jnp.where(causal[None, None], s, -1e9)
    p = jax.nn.softmax(s, axis=-1)
    attn = jnp.einsum("bhqk,bhkd->bhqd", p, vh)
    attn = attn.transpose(0, 2, 1, 3).reshape(B, S, D)
    m = attn @ params["wo"] + params["bo"]
    h1 = _layer_norm(x + m, params["g1"], params["be1"])
    f = _gelu(h1 @ params["w1"] + params["b1"]) @ params["w2"] + params["b2"]
    out = _layer_norm(h1 + f, params["g2"], params["be2"])
    return out, (kh, vh)


if __name__ == "__main__":
    B, S, D, H, F = 2, 8, 32, 4, 64

    key = jax.random.PRNGKey(0)
    k_x, k_p = jax.random.split(key)
    x = jax.random.normal(k_x, (B, S, D), jnp.float32)
    params = init_params(k_p, D, F, H)

    out, (K, V) = gpt_layer(x, params, num_heads=H)
    jax.block_until_ready((out, K, V))

    assert out.shape == (B, S, D)
    assert K.shape == (B, H, S, D // H)
    assert V.shape == (B, H, S, D // H)
    assert bool(jnp.all(jnp.isfinite(out)))

    # correctness vs. pure-JAX f32 reference (loose tolerance: bf16 MXU operands)
    ref_out, (ref_K, ref_V) = gpt_layer_reference(x, params, H)
    assert float(jnp.max(jnp.abs(out - ref_out))) < 1e-1
    assert float(jnp.max(jnp.abs(K - ref_K))) < 5e-2
    assert float(jnp.max(jnp.abs(V - ref_V))) < 5e-2

    print("KERNEL_OK")
</pallas_src>

<mosaic_0001>
module attributes {stable_mosaic.version = 11 : i64} {
  func.func @gpt_layer_kernel(%arg0: i32, %arg1: i32, %arg2: memref<1x8x32xf32, #tpu.memory_space<vmem>>, %arg3: memref<1x8x32xf32, #tpu.memory_space<vmem>>, %arg4: memref<32x32xbf16, #tpu.memory_space<vmem>>, %arg5: memref<1x32xf32, #tpu.memory_space<vmem>>, %arg6: memref<32x32xbf16, #tpu.memory_space<vmem>>, %arg7: memref<1x32xf32, #tpu.memory_space<vmem>>, %arg8: memref<32x32xbf16, #tpu.memory_space<vmem>>, %arg9: memref<1x32xf32, #tpu.memory_space<vmem>>, %arg10: memref<32x32xbf16, #tpu.memory_space<vmem>>, %arg11: memref<1x32xf32, #tpu.memory_space<vmem>>, %arg12: memref<32x64xbf16, #tpu.memory_space<vmem>>, %arg13: memref<1x64xf32, #tpu.memory_space<vmem>>, %arg14: memref<64x32xbf16, #tpu.memory_space<vmem>>, %arg15: memref<1x32xf32, #tpu.memory_space<vmem>>, %arg16: memref<1x32xf32, #tpu.memory_space<vmem>>, %arg17: memref<1x32xf32, #tpu.memory_space<vmem>>, %arg18: memref<1x32xf32, #tpu.memory_space<vmem>>, %arg19: memref<1x32xf32, #tpu.memory_space<vmem>>, %arg20: memref<1x8x32xf32, #tpu.memory_space<vmem>>, %arg21: memref<1x4x8x8xf32, #tpu.memory_space<vmem>>, %arg22: memref<1x4x8x8xf32, #tpu.memory_space<vmem>>) attributes {dimension_semantics = [#tpu.dimension_semantics<parallel>, #tpu.dimension_semantics<parallel>], iteration_bounds = array<i64: 2, 1>, scalar_prefetch = 0 : i64, scratch_operands = 0 : i64, tpu.core_type = #tpu.core_type<tc>, window_params = [{transform_indices = @transform_0, window_bounds = array<i64: 1, 8, 32>}, {transform_indices = @transform_1, window_bounds = array<i64: 1, 8, 32>}, {pipeline_mode = #tpu.pipeline_mode<synchronous>, transform_indices = @transform_2, window_bounds = array<i64: 32, 32>}, {pipeline_mode = #tpu.pipeline_mode<synchronous>, transform_indices = @transform_3, window_bounds = array<i64: 1, 32>}, {pipeline_mode = #tpu.pipeline_mode<synchronous>, transform_indices = @transform_4, window_bounds = array<i64: 32, 32>}, {pipeline_mode = #tpu.pipeline_mode<synchronous>, transform_indices = @transform_5, window_bounds = array<i64: 1, 32>}, {pipeline_mode = #tpu.pipeline_mode<synchronous>, transform_indices = @transform_6, window_bounds = array<i64: 32, 32>}, {pipeline_mode = #tpu.pipeline_mode<synchronous>, transform_indices = @transform_7, window_bounds = array<i64: 1, 32>}, {pipeline_mode = #tpu.pipeline_mode<synchronous>, transform_indices = @transform_8, window_bounds = array<i64: 32, 32>}, {pipeline_mode = #tpu.pipeline_mode<synchronous>, transform_indices = @transform_9, window_bounds = array<i64: 1, 32>}, {pipeline_mode = #tpu.pipeline_mode<synchronous>, transform_indices = @transform_10, window_bounds = array<i64: 32, 64>}, {pipeline_mode = #tpu.pipeline_mode<synchronous>, transform_indices = @transform_11, window_bounds = array<i64: 1, 64>}, {pipeline_mode = #tpu.pipeline_mode<synchronous>, transform_indices = @transform_12, window_bounds = array<i64: 64, 32>}, {pipeline_mode = #tpu.pipeline_mode<synchronous>, transform_indices = @transform_13, window_bounds = array<i64: 1, 32>}, {pipeline_mode = #tpu.pipeline_mode<synchronous>, transform_indices = @transform_14, window_bounds = array<i64: 1, 32>}, {pipeline_mode = #tpu.pipeline_mode<synchronous>, transform_indices = @transform_15, window_bounds = array<i64: 1, 32>}, {pipeline_mode = #tpu.pipeline_mode<synchronous>, transform_indices = @transform_16, window_bounds = array<i64: 1, 32>}, {pipeline_mode = #tpu.pipeline_mode<synchronous>, transform_indices = @transform_17, window_bounds = array<i64: 1, 32>}, {transform_indices = @transform_18, window_bounds = array<i64: 1, 8, 32>}, {transform_indices = @transform_19, window_bounds = array<i64: 1, 4, 8, 8>}, {transform_indices = @transform_20, window_bounds = array<i64: 1, 4, 8, 8>}]} {
    %c0 = arith.constant 0 : index
    %c0_0 = arith.constant 0 : index
    %c0_1 = arith.constant 0 : index
    %0 = vector.load %arg2[%c0, %c0_0, %c0_1] : memref<1x8x32xf32, #tpu.memory_space<vmem>>, vector<1x8x32xf32>
    %1 = vector.shape_cast %0 : vector<1x8x32xf32> to vector<8x32xf32>
    %c0_2 = arith.constant 0 : index
    %c0_3 = arith.constant 0 : index
    %c0_4 = arith.constant 0 : index
    %2 = vector.load %arg3[%c0_2, %c0_3, %c0_4] : memref<1x8x32xf32, #tpu.memory_space<vmem>>, vector<1x8x32xf32>
    %3 = vector.shape_cast %2 : vector<1x8x32xf32> to vector<8x32xf32>
    %4 = arith.truncf %3 : vector<8x32xf32> to vector<8x32xbf16>
    %5 = arith.truncf %1 : vector<8x32xf32> to vector<8x32xbf16>
    %c0_5 = arith.constant 0 : index
    %c0_6 = arith.constant 0 : index
    %6 = vector.load %arg5[%c0_5, %c0_6] : memref<1x32xf32, #tpu.memory_space<vmem>>, vector<1x32xf32>
    %c0_7 = arith.constant 0 : index
    %c0_8 = arith.constant 0 : index
    %7 = vector.load %arg7[%c0_7, %c0_8] : memref<1x32xf32, #tpu.memory_space<vmem>>, vector<1x32xf32>
    %c0_9 = arith.constant 0 : index
    %c0_10 = arith.constant 0 : index
    %8 = vector.load %arg9[%c0_9, %c0_10] : memref<1x32xf32, #tpu.memory_space<vmem>>, vector<1x32xf32>
    %c0_11 = arith.constant 0 : index
    %c0_12 = arith.constant 0 : index
    %9 = vector.load %arg11[%c0_11, %c0_12] : memref<1x32xf32, #tpu.memory_space<vmem>>, vector<1x32xf32>
    %c0_13 = arith.constant 0 : index
    %c0_14 = arith.constant 0 : index
    %10 = vector.load %arg13[%c0_13, %c0_14] : memref<1x64xf32, #tpu.memory_space<vmem>>, vector<1x64xf32>
    %c0_15 = arith.constant 0 : index
    %c0_16 = arith.constant 0 : index
    %11 = vector.load %arg15[%c0_15, %c0_16] : memref<1x32xf32, #tpu.memory_space<vmem>>, vector<1x32xf32>
    %c0_17 = arith.constant 0 : index
    %c0_18 = arith.constant 0 : index
    %12 = vector.load %arg16[%c0_17, %c0_18] : memref<1x32xf32, #tpu.memory_space<vmem>>, vector<1x32xf32>
    %c0_19 = arith.constant 0 : index
    %c0_20 = arith.constant 0 : index
    %13 = vector.load %arg17[%c0_19, %c0_20] : memref<1x32xf32, #tpu.memory_space<vmem>>, vector<1x32xf32>
    %c0_21 = arith.constant 0 : index
    %c0_22 = arith.constant 0 : index
    %14 = vector.load %arg18[%c0_21, %c0_22] : memref<1x32xf32, #tpu.memory_space<vmem>>, vector<1x32xf32>
    %c0_23 = arith.constant 0 : index
    %c0_24 = arith.constant 0 : index
    %15 = vector.load %arg19[%c0_23, %c0_24] : memref<1x32xf32, #tpu.memory_space<vmem>>, vector<1x32xf32>
    %c0_25 = arith.constant 0 : index
    %c0_26 = arith.constant 0 : index
    %16 = vector.load %arg10[%c0_25, %c0_26] : memref<32x32xbf16, #tpu.memory_space<vmem>>, vector<32x32xbf16>
    %c0_27 = arith.constant 0 : index
    %c0_28 = arith.constant 0 : index
    %17 = vector.load %arg4[%c0_27, %c0_28] : memref<32x32xbf16, #tpu.memory_space<vmem>>, vector<32x32xbf16>
    %cst = arith.constant dense<0.000000e+00> : vector<8x32xf32>
    %18 = tpu.matmul %5, %17, %cst {dimension_numbers = #tpu.dot_dimension_numbers<[1], [0], [0], [1], [0, 0, 1, 1], [], []>} : vector<8x32xbf16>, vector<32x32xbf16>, vector<8x32xf32> -> vector<8x32xf32>
    %19 = vector.broadcast %6 : vector<1x32xf32> to vector<8x32xf32>
    %20 = arith.addf %18, %19 : vector<8x32xf32>
    %c0_29 = arith.constant 0 : index
    %c0_30 = arith.constant 0 : index
    %21 = vector.load %arg6[%c0_29, %c0_30] : memref<32x32xbf16, #tpu.memory_space<vmem>>, vector<32x32xbf16>
    %cst_31 = arith.constant dense<0.000000e+00> : vector<8x32xf32>
    %22 = tpu.matmul %4, %21, %cst_31 {dimension_numbers = #tpu.dot_dimension_numbers<[1], [0], [0], [1], [0, 0, 1, 1], [], []>} : vector<8x32xbf16>, vector<32x32xbf16>, vector<8x32xf32> -> vector<8x32xf32>
    %23 = vector.broadcast %7 : vector<1x32xf32> to vector<8x32xf32>
    %24 = arith.addf %22, %23 : vector<8x32xf32>
    %c0_32 = arith.constant 0 : index
    %c0_33 = arith.constant 0 : index
    %25 = vector.load %arg8[%c0_32, %c0_33] : memref<32x32xbf16, #tpu.memory_space<vmem>>, vector<32x32xbf16>
    %cst_34 = arith.constant dense<0.000000e+00> : vector<8x32xf32>
    %26 = tpu.matmul %4, %25, %cst_34 {dimension_numbers = #tpu.dot_dimension_numbers<[1], [0], [0], [1], [0, 0, 1, 1], [], []>} : vector<8x32xbf16>, vector<32x32xbf16>, vector<8x32xf32> -> vector<8x32xf32>
    %27 = vector.broadcast %8 : vector<1x32xf32> to vector<8x32xf32>
    %28 = arith.addf %26, %27 : vector<8x32xf32>
    %29 = arith.truncf %20 : vector<8x32xf32> to vector<8x32xbf16>
    %30 = arith.truncf %24 : vector<8x32xf32> to vector<8x32xbf16>
    %31 = arith.truncf %28 : vector<8x32xf32> to vector<8x32xbf16>
    %c8_i32 = arith.constant 8 : i32
    %32 = arith.muli %arg1, %c8_i32 : i32
    %33 = tpu.iota {dimensions = array<i32: 0>} : vector<8x8xi32>
    %34 = vector.broadcast %32 : i32 to vector<8x8xi32>
    %35 = arith.addi %34, %33 : vector<8x8xi32>
    %36 = tpu.iota {dimensions = array<i32: 1>} : vector<8x8xi32>
    %37 = arith.cmpi sge, %35, %36 : vector<8x8xi32>
    %cst_35 = arith.constant 0.000000e+00 : f32
    %38 = vector.broadcast %cst_35 : f32 to vector<8x32xf32>
    %39 = vector.extract_strided_slice %29 {offsets = [0, 0], sizes = [8, 8], strides = [1, 1]} : vector<8x32xbf16> to vector<8x8xbf16>
    %40 = vector.extract_strided_slice %30 {offsets = [0, 0], sizes = [8, 8], strides = [1, 1]} : vector<8x32xbf16> to vector<8x8xbf16>
    %cst_36 = arith.constant dense<0.000000e+00> : vector<8x8xf32>
    %41 = tpu.matmul %39, %40, %cst_36 {dimension_numbers = #tpu.dot_dimension_numbers<[1], [1], [0], [0], [0, 0, 1, 0], [], []>} : vector<8x8xbf16>, vector<8x8xbf16>, vector<8x8xf32> -> vector<8x8xf32>
    %cst_37 = arith.constant 0.353553385 : f32
    %42 = vector.broadcast %cst_37 : f32 to vector<8x8xf32>
    %43 = arith.mulf %41, %42 : vector<8x8xf32>
    %cst_38 = arith.constant -1.000000e+09 : f32
    %44 = vector.broadcast %cst_38 : f32 to vector<8x8xf32>
    %45 = arith.select %37, %43, %44 : vector<8x8xi1>, vector<8x8xf32>
    %cst_39 = arith.constant dense<0xFF800000> : vector<8xf32>
    %46 = vector.multi_reduction <maximumf>, %45, %cst_39 [1] : vector<8x8xf32> to vector<8xf32>
    %47 = vector.shape_cast %46 : vector<8xf32> to vector<8x1xf32>
    %48 = vector.broadcast %47 : vector<8x1xf32> to vector<8x8xf32>
    %49 = arith.subf %45, %48 : vector<8x8xf32>
    %50 = math.exp %49 : vector<8x8xf32>
    %cst_40 = arith.constant dense<0.000000e+00> : vector<8xf32>
    %51 = vector.multi_reduction <add>, %50, %cst_40 [1] : vector<8x8xf32> to vector<8xf32>
    %52 = vector.shape_cast %51 : vector<8xf32> to vector<8x1xf32>
    %53 = tpu.reciprocal %52 {approx = true} : vector<8x1xf32> -> vector<8x1xf32>
    %54 = vector.broadcast %53 : vector<8x1xf32> to vector<8x8xf32>
    %55 = arith.mulf %50, %54 : vector<8x8xf32>
    %56 = arith.truncf %55 : vector<8x8xf32> to vector<8x8xbf16>
    %57 = vector.extract_strided_slice %31 {offsets = [0, 0], sizes = [8, 8], strides = [1, 1]} : vector<8x32xbf16> to vector<8x8xbf16>
    %cst_41 = arith.constant dense<0.000000e+00> : vector<8x8xf32>
    %58 = tpu.matmul %56, %57, %cst_41 {dimension_numbers = #tpu.dot_dimension_numbers<[1], [0], [0], [1], [0, 0, 1, 1], [], []>} : vector<8x8xbf16>, vector<8x8xbf16>, vector<8x8xf32> -> vector<8x8xf32>
    %59 = arith.truncf %58 : vector<8x8xf32> to vector<8x8xbf16>
    %60 = vector.extract_strided_slice %16 {offsets = [0, 0], sizes = [8, 32], strides = [1, 1]} : vector<32x32xbf16> to vector<8x32xbf16>
    %cst_42 = arith.constant dense<0.000000e+00> : vector<8x32xf32>
    %61 = tpu.matmul %59, %60, %cst_42 {dimension_numbers = #tpu.dot_dimension_numbers<[1], [0], [0], [1], [0, 0, 1, 1], [], []>} : vector<8x8xbf16>, vector<8x32xbf16>, vector<8x32xf32> -> vector<8x32xf32>
    %62 = arith.addf %38, %61 : vector<8x32xf32>
    %63 = vector.extract_strided_slice %24 {offsets = [0, 0], sizes = [8, 8], strides = [1, 1]} : vector<8x32xf32> to vector<8x8xf32>
    %c0_43 = arith.constant 0 : index
    %c0_44 = arith.constant 0 : index
    %c0_45 = arith.constant 0 : index
    %c0_46 = arith.constant 0 : index
    %64 = vector.load %arg21[%c0_43, %c0_44, %c0_45, %c0_46] : memref<1x4x8x8xf32, #tpu.memory_space<vmem>>, vector<1x1x8x8xf32>
    %65 = vector.shape_cast %64 : vector<1x1x8x8xf32> to vector<8x8xf32>
    %66 = vector.shape_cast %63 : vector<8x8xf32> to vector<1x1x8x8xf32>
    tpu.vector_store %arg21[%c0_43, %c0_44, %c0_45, %c0_46], %66 {strides = array<i32>} : memref<1x4x8x8xf32, #tpu.memory_space<vmem>>, vector<1x1x8x8xf32>,
    %67 = vector.extract_strided_slice %28 {offsets = [0, 0], sizes = [8, 8], strides = [1, 1]} : vector<8x32xf32> to vector<8x8xf32>
    %c0_47 = arith.constant 0 : index
    %c0_48 = arith.constant 0 : index
    %c0_49 = arith.constant 0 : index
    %c0_50 = arith.constant 0 : index
    %68 = vector.load %arg22[%c0_47, %c0_48, %c0_49, %c0_50] : memref<1x4x8x8xf32, #tpu.memory_space<vmem>>, vector<1x1x8x8xf32>
    %69 = vector.shape_cast %68 : vector<1x1x8x8xf32> to vector<8x8xf32>
    %70 = vector.shape_cast %67 : vector<8x8xf32> to vector<1x1x8x8xf32>
    tpu.vector_store %arg22[%c0_47, %c0_48, %c0_49, %c0_50], %70 {strides = array<i32>} : memref<1x4x8x8xf32, #tpu.memory_space<vmem>>, vector<1x1x8x8xf32>,
    %71 = vector.extract_strided_slice %29 {offsets = [0, 8], sizes = [8, 8], strides = [1, 1]} : vector<8x32xbf16> to vector<8x8xbf16>
    %72 = vector.extract_strided_slice %30 {offsets = [0, 8], sizes = [8, 8], strides = [1, 1]} : vector<8x32xbf16> to vector<8x8xbf16>
    %cst_51 = arith.constant dense<0.000000e+00> : vector<8x8xf32>
    %73 = tpu.matmul %71, %72, %cst_51 {dimension_numbers = #tpu.dot_dimension_numbers<[1], [1], [0], [0], [0, 0, 1, 0], [], []>} : vector<8x8xbf16>, vector<8x8xbf16>, vector<8x8xf32> -> vector<8x8xf32>
    %cst_52 = arith.constant 0.353553385 : f32
    %74 = vector.broadcast %cst_52 : f32 to vector<8x8xf32>
    %75 = arith.mulf %73, %74 : vector<8x8xf32>
    %cst_53 = arith.constant -1.000000e+09 : f32
    %76 = vector.broadcast %cst_53 : f32 to vector<8x8xf32>
    %77 = arith.select %37, %75, %76 : vector<8x8xi1>, vector<8x8xf32>
    %cst_54 = arith.constant dense<0xFF800000> : vector<8xf32>
    %78 = vector.multi_reduction <maximumf>, %77, %cst_54 [1] : vector<8x8xf32> to vector<8xf32>
    %79 = vector.shape_cast %78 : vector<8xf32> to vector<8x1xf32>
    %80 = vector.broadcast %79 : vector<8x1xf32> to vector<8x8xf32>
    %81 = arith.subf %77, %80 : vector<8x8xf32>
    %82 = math.exp %81 : vector<8x8xf32>
    %cst_55 = arith.constant dense<0.000000e+00> : vector<8xf32>
    %83 = vector.multi_reduction <add>, %82, %cst_55 [1] : vector<8x8xf32> to vector<8xf32>
    %84 = vector.shape_cast %83 : vector<8xf32> to vector<8x1xf32>
    %85 = tpu.reciprocal %84 {approx = true} : vector<8x1xf32> -> vector<8x1xf32>
    %86 = vector.broadcast %85 : vector<8x1xf32> to vector<8x8xf32>
    %87 = arith.mulf %82, %86 : vector<8x8xf32>
    %88 = arith.truncf %87 : vector<8x8xf32> to vector<8x8xbf16>
    %89 = vector.extract_strided_slice %31 {offsets = [0, 8], sizes = [8, 8], strides = [1, 1]} : vector<8x32xbf16> to vector<8x8xbf16>
    %cst_56 = arith.constant dense<0.000000e+00> : vector<8x8xf32>
    %90 = tpu.matmul %88, %89, %cst_56 {dimension_numbers = #tpu.dot_dimension_numbers<[1], [0], [0], [1], [0, 0, 1, 1], [], []>} : vector<8x8xbf16>, vector<8x8xbf16>, vector<8x8xf32> -> vector<8x8xf32>
    %91 = arith.truncf %90 : vector<8x8xf32> to vector<8x8xbf16>
    %92 = vector.extract_strided_slice %16 {offsets = [8, 0], sizes = [8, 32], strides = [1, 1]} : vector<32x32xbf16> to vector<8x32xbf16>
    %cst_57 = arith.constant dense<0.000000e+00> : vector<8x32xf32>
    %93 = tpu.matmul %91, %92, %cst_57 {dimension_numbers = #tpu.dot_dimension_numbers<[1], [0], [0], [1], [0, 0, 1, 1], [], []>} : vector<8x8xbf16>, vector<8x32xbf16>, vector<8x32xf32> -> vector<8x32xf32>
    %94 = arith.addf %62, %93 : vector<8x32xf32>
    %95 = vector.extract_strided_slice %24 {offsets = [0, 8], sizes = [8, 8], strides = [1, 1]} : vector<8x32xf32> to vector<8x8xf32>
    %c0_58 = arith.constant 0 : index
    %c1 = arith.constant 1 : index
    %c0_59 = arith.constant 0 : index
    %c0_60 = arith.constant 0 : index
    %96 = vector.load %arg21[%c0_58, %c1, %c0_59, %c0_60] : memref<1x4x8x8xf32, #tpu.memory_space<vmem>>, vector<1x1x8x8xf32>
    %97 = vector.shape_cast %96 : vector<1x1x8x8xf32> to vector<8x8xf32>
    %98 = vector.shape_cast %95 : vector<8x8xf32> to vector<1x1x8x8xf32>
    tpu.vector_store %arg21[%c0_58, %c1, %c0_59, %c0_60], %98 {strides = array<i32>} : memref<1x4x8x8xf32, #tpu.memory_space<vmem>>, vector<1x1x8x8xf32>,
    %99 = vector.extract_strided_slice %28 {offsets = [0, 8], sizes = [8, 8], strides = [1, 1]} : vector<8x32xf32> to vector<8x8xf32>
    %c0_61 = arith.constant 0 : index
    %c1_62 = arith.constant 1 : index
    %c0_63 = arith.constant 0 : index
    %c0_64 = arith.constant 0 : index
    %100 = vector.load %arg22[%c0_61, %c1_62, %c0_63, %c0_64] : memref<1x4x8x8xf32, #tpu.memory_space<vmem>>, vector<1x1x8x8xf32>
    %101 = vector.shape_cast %100 : vector<1x1x8x8xf32> to vector<8x8xf32>
    %102 = vector.shape_cast %99 : vector<8x8xf32> to vector<1x1x8x8xf32>
    tpu.vector_store %arg22[%c0_61, %c1_62, %c0_63, %c0_64], %102 {strides = array<i32>} : memref<1x4x8x8xf32, #tpu.memory_space<vmem>>, vector<1x1x8x8xf32>,
    %103 = vector.extract_strided_slice %29 {offsets = [0, 16], sizes = [8, 8], strides = [1, 1]} : vector<8x32xbf16> to vector<8x8xbf16>
    %104 = vector.extract_strided_slice %30 {offsets = [0, 16], sizes = [8, 8], strides = [1, 1]} : vector<8x32xbf16> to vector<8x8xbf16>
    %cst_65 = arith.constant dense<0.000000e+00> : vector<8x8xf32>
    %105 = tpu.matmul %103, %104, %cst_65 {dimension_numbers = #tpu.dot_dimension_numbers<[1], [1], [0], [0], [0, 0, 1, 0], [], []>} : vector<8x8xbf16>, vector<8x8xbf16>, vector<8x8xf32> -> vector<8x8xf32>
    %cst_66 = arith.constant 0.353553385 : f32
    %106 = vector.broadcast %cst_66 : f32 to vector<8x8xf32>
    %107 = arith.mulf %105, %106 : vector<8x8xf32>
    %cst_67 = arith.constant -1.000000e+09 : f32
    %108 = vector.broadcast %cst_67 : f32 to vector<8x8xf32>
    %109 = arith.select %37, %107, %108 : vector<8x8xi1>, vector<8x8xf32>
    %cst_68 = arith.constant dense<0xFF800000> : vector<8xf32>
    %110 = vector.multi_reduction <maximumf>, %109, %cst_68 [1] : vector<8x8xf32> to vector<8xf32>
    %111 = vector.shape_cast %110 : vector<8xf32> to vector<8x1xf32>
    %112 = vector.broadcast %111 : vector<8x1xf32> to vector<8x8xf32>
    %113 = arith.subf %109, %112 : vector<8x8xf32>
    %114 = math.exp %113 : vector<8x8xf32>
    %cst_69 = arith.constant dense<0.000000e+00> : vector<8xf32>
    %115 = vector.multi_reduction <add>, %114, %cst_69 [1] : vector<8x8xf32> to vector<8xf32>
    %116 = vector.shape_cast %115 : vector<8xf32> to vector<8x1xf32>
    %117 = tpu.reciprocal %116 {approx = true} : vector<8x1xf32> -> vector<8x1xf32>
    %118 = vector.broadcast %117 : vector<8x1xf32> to vector<8x8xf32>
    %119 = arith.mulf %114, %118 : vector<8x8xf32>
    %120 = arith.truncf %119 : vector<8x8xf32> to vector<8x8xbf16>
    %121 = vector.extract_strided_slice %31 {offsets = [0, 16], sizes = [8, 8], strides = [1, 1]} : vector<8x32xbf16> to vector<8x8xbf16>
    %cst_70 = arith.constant dense<0.000000e+00> : vector<8x8xf32>
    %122 = tpu.matmul %120, %121, %cst_70 {dimension_numbers = #tpu.dot_dimension_numbers<[1], [0], [0], [1], [0, 0, 1, 1], [], []>} : vector<8x8xbf16>, vector<8x8xbf16>, vector<8x8xf32> -> vector<8x8xf32>
    %123 = arith.truncf %122 : vector<8x8xf32> to vector<8x8xbf16>
    %124 = vector.extract_strided_slice %16 {offsets = [16, 0], sizes = [8, 32], strides = [1, 1]} : vector<32x32xbf16> to vector<8x32xbf16>
    %cst_71 = arith.constant dense<0.000000e+00> : vector<8x32xf32>
    %125 = tpu.matmul %123, %124, %cst_71 {dimension_numbers = #tpu.dot_dimension_numbers<[1], [0], [0], [1], [0, 0, 1, 1], [], []>} : vector<8x8xbf16>, vector<8x32xbf16>, vector<8x32xf32> -> vector<8x32xf32>
    %126 = arith.addf %94, %125 : vector<8x32xf32>
    %127 = vector.extract_strided_slice %24 {offsets = [0, 16], sizes = [8, 8], strides = [1, 1]} : vector<8x32xf32> to vector<8x8xf32>
    %c0_72 = arith.constant 0 : index
    %c2 = arith.constant 2 : index
    %c0_73 = arith.constant 0 : index
    %c0_74 = arith.constant 0 : index
    %128 = vector.load %arg21[%c0_72, %c2, %c0_73, %c0_74] : memref<1x4x8x8xf32, #tpu.memory_space<vmem>>, vector<1x1x8x8xf32>
    %129 = vector.shape_cast %128 : vector<1x1x8x8xf32> to vector<8x8xf32>
    %130 = vector.shape_cast %127 : vector<8x8xf32> to vector<1x1x8x8xf32>
    tpu.vector_store %arg21[%c0_72, %c2, %c0_73, %c0_74], %130 {strides = array<i32>} : memref<1x4x8x8xf32, #tpu.memory_space<vmem>>, vector<1x1x8x8xf32>,
    %131 = vector.extract_strided_slice %28 {offsets = [0, 16], sizes = [8, 8], strides = [1, 1]} : vector<8x32xf32> to vector<8x8xf32>
    %c0_75 = arith.constant 0 : index
    %c2_76 = arith.constant 2 : index
    %c0_77 = arith.constant 0 : index
    %c0_78 = arith.constant 0 : index
    %132 = vector.load %arg22[%c0_75, %c2_76, %c0_77, %c0_78] : memref<1x4x8x8xf32, #tpu.memory_space<vmem>>, vector<1x1x8x8xf32>
    %133 = vector.shape_cast %132 : vector<1x1x8x8xf32> to vector<8x8xf32>
    %134 = vector.shape_cast %131 : vector<8x8xf32> to vector<1x1x8x8xf32>
    tpu.vector_store %arg22[%c0_75, %c2_76, %c0_77, %c0_78], %134 {strides = array<i32>} : memref<1x4x8x8xf32, #tpu.memory_space<vmem>>, vector<1x1x8x8xf32>,
    %135 = vector.extract_strided_slice %29 {offsets = [0, 24], sizes = [8, 8], strides = [1, 1]} : vector<8x32xbf16> to vector<8x8xbf16>
    %136 = vector.extract_strided_slice %30 {offsets = [0, 24], sizes = [8, 8], strides = [1, 1]} : vector<8x32xbf16> to vector<8x8xbf16>
    %cst_79 = arith.constant dense<0.000000e+00> : vector<8x8xf32>
    %137 = tpu.matmul %135, %136, %cst_79 {dimension_numbers = #tpu.dot_dimension_numbers<[1], [1], [0], [0], [0, 0, 1, 0], [], []>} : vector<8x8xbf16>, vector<8x8xbf16>, vector<8x8xf32> -> vector<8x8xf32>
    %cst_80 = arith.constant 0.353553385 : f32
    %138 = vector.broadcast %cst_80 : f32 to vector<8x8xf32>
    %139 = arith.mulf %137, %138 : vector<8x8xf32>
    %cst_81 = arith.constant -1.000000e+09 : f32
    %140 = vector.broadcast %cst_81 : f32 to vector<8x8xf32>
    %141 = arith.select %37, %139, %140 : vector<8x8xi1>, vector<8x8xf32>
    %cst_82 = arith.constant dense<0xFF800000> : vector<8xf32>
    %142 = vector.multi_reduction <maximumf>, %141, %cst_82 [1] : vector<8x8xf32> to vector<8xf32>
    %143 = vector.shape_cast %142 : vector<8xf32> to vector<8x1xf32>
    %144 = vector.broadcast %143 : vector<8x1xf32> to vector<8x8xf32>
    %145 = arith.subf %141, %144 : vector<8x8xf32>
    %146 = math.exp %145 : vector<8x8xf32>
    %cst_83 = arith.constant dense<0.000000e+00> : vector<8xf32>
    %147 = vector.multi_reduction <add>, %146, %cst_83 [1] : vector<8x8xf32> to vector<8xf32>
    %148 = vector.shape_cast %147 : vector<8xf32> to vector<8x1xf32>
    %149 = tpu.reciprocal %148 {approx = true} : vector<8x1xf32> -> vector<8x1xf32>
    %150 = vector.broadcast %149 : vector<8x1xf32> to vector<8x8xf32>
    %151 = arith.mulf %146, %150 : vector<8x8xf32>
    %152 = arith.truncf %151 : vector<8x8xf32> to vector<8x8xbf16>
    %153 = vector.extract_strided_slice %31 {offsets = [0, 24], sizes = [8, 8], strides = [1, 1]} : vector<8x32xbf16> to vector<8x8xbf16>
    %cst_84 = arith.constant dense<0.000000e+00> : vector<8x8xf32>
    %154 = tpu.matmul %152, %153, %cst_84 {dimension_numbers = #tpu.dot_dimension_numbers<[1], [0], [0], [1], [0, 0, 1, 1], [], []>} : vector<8x8xbf16>, vector<8x8xbf16>, vector<8x8xf32> -> vector<8x8xf32>
    %155 = arith.truncf %154 : vector<8x8xf32> to vector<8x8xbf16>
    %156 = vector.extract_strided_slice %16 {offsets = [24, 0], sizes = [8, 32], strides = [1, 1]} : vector<32x32xbf16> to vector<8x32xbf16>
    %cst_85 = arith.constant dense<0.000000e+00> : vector<8x32xf32>
    %157 = tpu.matmul %155, %156, %cst_85 {dimension_numbers = #tpu.dot_dimension_numbers<[1], [0], [0], [1], [0, 0, 1, 1], [], []>} : vector<8x8xbf16>, vector<8x32xbf16>, vector<8x32xf32> -> vector<8x32xf32>
    %158 = arith.addf %126, %157 : vector<8x32xf32>
    %159 = vector.extract_strided_slice %24 {offsets = [0, 24], sizes = [8, 8], strides = [1, 1]} : vector<8x32xf32> to vector<8x8xf32>
    %c0_86 = arith.constant 0 : index
    %c3 = arith.constant 3 : index
    %c0_87 = arith.constant 0 : index
    %c0_88 = arith.constant 0 : index
    %160 = vector.load %arg21[%c0_86, %c3, %c0_87, %c0_88] : memref<1x4x8x8xf32, #tpu.memory_space<vmem>>, vector<1x1x8x8xf32>
    %161 = vector.shape_cast %160 : vector<1x1x8x8xf32> to vector<8x8xf32>
    %162 = vector.shape_cast %159 : vector<8x8xf32> to vector<1x1x8x8xf32>
    tpu.vector_store %arg21[%c0_86, %c3, %c0_87, %c0_88], %162 {strides = array<i32>} : memref<1x4x8x8xf32, #tpu.memory_space<vmem>>, vector<1x1x8x8xf32>,
    %163 = vector.extract_strided_slice %28 {offsets = [0, 24], sizes = [8, 8], strides = [1, 1]} : vector<8x32xf32> to vector<8x8xf32>
    %c0_89 = arith.constant 0 : index
    %c3_90 = arith.constant 3 : index
    %c0_91 = arith.constant 0 : index
    %c0_92 = arith.constant 0 : index
    %164 = vector.load %arg22[%c0_89, %c3_90, %c0_91, %c0_92] : memref<1x4x8x8xf32, #tpu.memory_space<vmem>>, vector<1x1x8x8xf32>
    %165 = vector.shape_cast %164 : vector<1x1x8x8xf32> to vector<8x8xf32>
    %166 = vector.shape_cast %163 : vector<8x8xf32> to vector<1x1x8x8xf32>
    tpu.vector_store %arg22[%c0_89, %c3_90, %c0_91, %c0_92], %166 {strides = array<i32>} : memref<1x4x8x8xf32, #tpu.memory_space<vmem>>, vector<1x1x8x8xf32>,
    %167 = vector.broadcast %9 : vector<1x32xf32> to vector<8x32xf32>
    %168 = arith.addf %158, %167 : vector<8x32xf32>
    %169 = arith.addf %1, %168 : vector<8x32xf32>
    %cst_93 = arith.constant dense<0.000000e+00> : vector<8xf32>
    %170 = vector.multi_reduction <add>, %169, %cst_93 [1] : vector<8x32xf32> to vector<8xf32>
    %171 = vector.shape_cast %170 : vector<8xf32> to vector<8x1xf32>
    %cst_94 = arith.constant 3.200000e+01 : f32
    %172 = vector.broadcast %cst_94 : f32 to vector<8x1xf32>
    %173 = arith.divf %171, %172 : vector<8x1xf32>
    %174 = vector.broadcast %173 : vector<8x1xf32> to vector<8x32xf32>
    %175 = arith.subf %169, %174 : vector<8x32xf32>
    %176 = arith.mulf %175, %175 : vector<8x32xf32>
    %cst_95 = arith.constant dense<0.000000e+00> : vector<8xf32>
    %177 = vector.multi_reduction <add>, %176, %cst_95 [1] : vector<8x32xf32> to vector<8xf32>
    %178 = vector.shape_cast %177 : vector<8xf32> to vector<8x1xf32>
    %cst_96 = arith.constant 3.200000e+01 : f32
    %179 = vector.broadcast %cst_96 : f32 to vector<8x1xf32>
    %180 = arith.divf %178, %179 : vector<8x1xf32>
    %181 = vector.broadcast %173 : vector<8x1xf32> to vector<8x32xf32>
    %182 = arith.subf %169, %181 : vector<8x32xf32>
    %cst_97 = arith.constant 9.99999974E-6 : f32
    %183 = vector.broadcast %cst_97 : f32 to vector<8x1xf32>
    %184 = arith.addf %180, %183 : vector<8x1xf32>
    %185 = math.rsqrt %184 : vector<8x1xf32>
    %186 = vector.broadcast %185 : vector<8x1xf32> to vector<8x32xf32>
    %187 = arith.mulf %182, %186 : vector<8x32xf32>
    %188 = vector.broadcast %12 : vector<1x32xf32> to vector<8x32xf32>
    %189 = arith.mulf %187, %188 : vector<8x32xf32>
    %190 = vector.broadcast %13 : vector<1x32xf32> to vector<8x32xf32>
    %191 = arith.addf %189, %190 : vector<8x32xf32>
    %192 = arith.truncf %191 : vector<8x32xf32> to vector<8x32xbf16>
    %c0_98 = arith.constant 0 : index
    %c0_99 = arith.constant 0 : index
    %193 = vector.load %arg12[%c0_98, %c0_99] : memref<32x64xbf16, #tpu.memory_space<vmem>>, vector<32x64xbf16>
    %cst_100 = arith.constant dense<0.000000e+00> : vector<8x64xf32>
    %194 = tpu.matmul %192, %193, %cst_100 {dimension_numbers = #tpu.dot_dimension_numbers<[1], [0], [0], [1], [0, 0, 1, 1], [], []>} : vector<8x32xbf16>, vector<32x64xbf16>, vector<8x64xf32> -> vector<8x64xf32>
    %195 = vector.broadcast %10 : vector<1x64xf32> to vector<8x64xf32>
    %196 = arith.addf %194, %195 : vector<8x64xf32>
    %cst_101 = arith.constant 5.000000e-01 : f32
    %197 = vector.broadcast %cst_101 : f32 to vector<8x64xf32>
    %198 = arith.mulf %197, %196 : vector<8x64xf32>
    %cst_102 = arith.constant 4.471500e-02 : f32
    %199 = vector.broadcast %cst_102 : f32 to vector<8x64xf32>
    %200 = arith.mulf %199, %196 : vector<8x64xf32>
    %201 = arith.mulf %200, %196 : vector<8x64xf32>
    %202 = arith.mulf %201, %196 : vector<8x64xf32>
    %203 = arith.addf %196, %202 : vector<8x64xf32>
    %cst_103 = arith.constant 0.797884583 : f32
    %204 = vector.broadcast %cst_103 : f32 to vector<8x64xf32>
    %205 = arith.mulf %204, %203 : vector<8x64xf32>
    %206 = math.tanh %205 : vector<8x64xf32>
    %cst_104 = arith.constant 1.000000e+00 : f32
    %207 = vector.broadcast %cst_104 : f32 to vector<8x64xf32>
    %208 = arith.addf %207, %206 : vector<8x64xf32>
    %209 = arith.mulf %198, %208 : vector<8x64xf32>
    %210 = arith.truncf %209 : vector<8x64xf32> to vector<8x64xbf16>
    %c0_105 = arith.constant 0 : index
    %c0_106 = arith.constant 0 : index
    %211 = vector.load %arg14[%c0_105, %c0_106] : memref<64x32xbf16, #tpu.memory_space<vmem>>, vector<64x32xbf16>
    %cst_107 = arith.constant dense<0.000000e+00> : vector<8x32xf32>
    %212 = tpu.matmul %210, %211, %cst_107 {dimension_numbers = #tpu.dot_dimension_numbers<[1], [0], [0], [1], [0, 0, 1, 1], [], []>} : vector<8x64xbf16>, vector<64x32xbf16>, vector<8x32xf32> -> vector<8x32xf32>
    %213 = vector.broadcast %11 : vector<1x32xf32> to vector<8x32xf32>
    %214 = arith.addf %212, %213 : vector<8x32xf32>
    %215 = arith.addf %191, %214 : vector<8x32xf32>
    %cst_108 = arith.constant dense<0.000000e+00> : vector<8xf32>
    %216 = vector.multi_reduction <add>, %215, %cst_108 [1] : vector<8x32xf32> to vector<8xf32>
    %217 = vector.shape_cast %216 : vector<8xf32> to vector<8x1xf32>
    %cst_109 = arith.constant 3.200000e+01 : f32
    %218 = vector.broadcast %cst_109 : f32 to vector<8x1xf32>
    %219 = arith.divf %217, %218 : vector<8x1xf32>
    %220 = vector.broadcast %219 : vector<8x1xf32> to vector<8x32xf32>
    %221 = arith.subf %215, %220 : vector<8x32xf32>
    %222 = arith.mulf %221, %221 : vector<8x32xf32>
    %cst_110 = arith.constant dense<0.000000e+00> : vector<8xf32>
    %223 = vector.multi_reduction <add>, %222, %cst_110 [1] : vector<8x32xf32> to vector<8xf32>
    %224 = vector.shape_cast %223 : vector<8xf32> to vector<8x1xf32>
    %cst_111 = arith.constant 3.200000e+01 : f32
    %225 = vector.broadcast %cst_111 : f32 to vector<8x1xf32>
    %226 = arith.divf %224, %225 : vector<8x1xf32>
    %227 = vector.broadcast %219 : vector<8x1xf32> to vector<8x32xf32>
    %228 = arith.subf %215, %227 : vector<8x32xf32>
    %cst_112 = arith.constant 9.99999974E-6 : f32
    %229 = vector.broadcast %cst_112 : f32 to vector<8x1xf32>
    %230 = arith.addf %226, %229 : vector<8x1xf32>
    %231 = math.rsqrt %230 : vector<8x1xf32>
    %232 = vector.broadcast %231 : vector<8x1xf32> to vector<8x32xf32>
    %233 = arith.mulf %228, %232 : vector<8x32xf32>
    %234 = vector.broadcast %14 : vector<1x32xf32> to vector<8x32xf32>
    %235 = arith.mulf %233, %234 : vector<8x32xf32>
    %236 = vector.broadcast %15 : vector<1x32xf32> to vector<8x32xf32>
    %237 = arith.addf %235, %236 : vector<8x32xf32>
    %c0_113 = arith.constant 0 : index
    %c0_114 = arith.constant 0 : index
    %c0_115 = arith.constant 0 : index
    %238 = vector.load %arg20[%c0_113, %c0_114, %c0_115] : memref<1x8x32xf32, #tpu.memory_space<vmem>>, vector<1x8x32xf32>
    %239 = vector.shape_cast %238 : vector<1x8x32xf32> to vector<8x32xf32>
    %240 = vector.shape_cast %237 : vector<8x32xf32> to vector<1x8x32xf32>
    tpu.vector_store %arg20[%c0_113, %c0_114, %c0_115], %240 {strides = array<i32>} : memref<1x8x32xf32, #tpu.memory_space<vmem>>, vector<1x8x32xf32>,
    return
  }
  func.func @transform_0(%arg0: i32, %arg1: i32) -> (i32, i32, i32) {
    %c0_i32 = arith.constant 0 : i32
    %c0_i32_0 = arith.constant 0 : i32
    return %arg0, %arg1, %c0_i32 : i32, i32, i32
  }
  func.func @transform_1(%arg0: i32, %arg1: i32) -> (i32, i32, i32) {
    %c0_i32 = arith.constant 0 : i32
    %c0_i32_0 = arith.constant 0 : i32
    %c0_i32_1 = arith.constant 0 : i32
    return %arg0, %c0_i32, %c0_i32_0 : i32, i32, i32
  }
  func.func @transform_2(%arg0: i32, %arg1: i32) -> (i32, i32) {
    %c0_i32 = arith.constant 0 : i32
    %c0_i32_0 = arith.constant 0 : i32
    %c0_i32_1 = arith.constant 0 : i32
    return %c0_i32, %c0_i32_0 : i32, i32
  }
  func.func @transform_3(%arg0: i32, %arg1: i32) -> (i32, i32) {
    %c0_i32 = arith.constant 0 : i32
    %c0_i32_0 = arith.constant 0 : i32
    %c0_i32_1 = arith.constant 0 : i32
    return %c0_i32, %c0_i32_0 : i32, i32
  }
  func.func @transform_4(%arg0: i32, %arg1: i32) -> (i32, i32) {
    %c0_i32 = arith.constant 0 : i32
    %c0_i32_0 = arith.constant 0 : i32
    %c0_i32_1 = arith.constant 0 : i32
    return %c0_i32, %c0_i32_0 : i32, i32
  }
  func.func @transform_5(%arg0: i32, %arg1: i32) -> (i32, i32) {
    %c0_i32 = arith.constant 0 : i32
    %c0_i32_0 = arith.constant 0 : i32
    %c0_i32_1 = arith.constant 0 : i32
    return %c0_i32, %c0_i32_0 : i32, i32
  }
  func.func @transform_6(%arg0: i32, %arg1: i32) -> (i32, i32) {
    %c0_i32 = arith.constant 0 : i32
    %c0_i32_0 = arith.constant 0 : i32
    %c0_i32_1 = arith.constant 0 : i32
    return %c0_i32, %c0_i32_0 : i32, i32
  }
  func.func @transform_7(%arg0: i32, %arg1: i32) -> (i32, i32) {
    %c0_i32 = arith.constant 0 : i32
    %c0_i32_0 = arith.constant 0 : i32
    %c0_i32_1 = arith.constant 0 : i32
    return %c0_i32, %c0_i32_0 : i32, i32
  }
  func.func @transform_8(%arg0: i32, %arg1: i32) -> (i32, i32) {
    %c0_i32 = arith.constant 0 : i32
    %c0_i32_0 = arith.constant 0 : i32
    %c0_i32_1 = arith.constant 0 : i32
    return %c0_i32, %c0_i32_0 : i32, i32
  }
  func.func @transform_9(%arg0: i32, %arg1: i32) -> (i32, i32) {
    %c0_i32 = arith.constant 0 : i32
    %c0_i32_0 = arith.constant 0 : i32
    %c0_i32_1 = arith.constant 0 : i32
    return %c0_i32, %c0_i32_0 : i32, i32
  }
  func.func @transform_10(%arg0: i32, %arg1: i32) -> (i32, i32) {
    %c0_i32 = arith.constant 0 : i32
    %c0_i32_0 = arith.constant 0 : i32
    %c0_i32_1 = arith.constant 0 : i32
    return %c0_i32, %c0_i32_0 : i32, i32
  }
  func.func @transform_11(%arg0: i32, %arg1: i32) -> (i32, i32) {
    %c0_i32 = arith.constant 0 : i32
    %c0_i32_0 = arith.constant 0 : i32
    %c0_i32_1 = arith.constant 0 : i32
    return %c0_i32, %c0_i32_0 : i32, i32
  }
  func.func @transform_12(%arg0: i32, %arg1: i32) -> (i32, i32) {
    %c0_i32 = arith.constant 0 : i32
    %c0_i32_0 = arith.constant 0 : i32
    %c0_i32_1 = arith.constant 0 : i32
    return %c0_i32, %c0_i32_0 : i32, i32
  }
  func.func @transform_13(%arg0: i32, %arg1: i32) -> (i32, i32) {
    %c0_i32 = arith.constant 0 : i32
    %c0_i32_0 = arith.constant 0 : i32
    %c0_i32_1 = arith.constant 0 : i32
    return %c0_i32, %c0_i32_0 : i32, i32
  }
  func.func @transform_14(%arg0: i32, %arg1: i32) -> (i32, i32) {
    %c0_i32 = arith.constant 0 : i32
    %c0_i32_0 = arith.constant 0 : i32
    %c0_i32_1 = arith.constant 0 : i32
    return %c0_i32, %c0_i32_0 : i32, i32
  }
  func.func @transform_15(%arg0: i32, %arg1: i32) -> (i32, i32) {
    %c0_i32 = arith.constant 0 : i32
    %c0_i32_0 = arith.constant 0 : i32
    %c0_i32_1 = arith.constant 0 : i32
    return %c0_i32, %c0_i32_0 : i32, i32
  }
  func.func @transform_16(%arg0: i32, %arg1: i32) -> (i32, i32) {
    %c0_i32 = arith.constant 0 : i32
    %c0_i32_0 = arith.constant 0 : i32
    %c0_i32_1 = arith.constant 0 : i32
    return %c0_i32, %c0_i32_0 : i32, i32
  }
  func.func @transform_17(%arg0: i32, %arg1: i32) -> (i32, i32) {
    %c0_i32 = arith.constant 0 : i32
    %c0_i32_0 = arith.constant 0 : i32
    %c0_i32_1 = arith.constant 0 : i32
    return %c0_i32, %c0_i32_0 : i32, i32
  }
  func.func @transform_18(%arg0: i32, %arg1: i32) -> (i32, i32, i32) {
    %c0_i32 = arith.constant 0 : i32
    %c0_i32_0 = arith.constant 0 : i32
    return %arg0, %arg1, %c0_i32 : i32, i32, i32
  }
  func.func @transform_19(%arg0: i32, %arg1: i32) -> (i32, i32, i32, i32) {
    %c0_i32 = arith.constant 0 : i32
    %c0_i32_0 = arith.constant 0 : i32
    %c0_i32_1 = arith.constant 0 : i32
    return %arg0, %c0_i32, %arg1, %c0_i32_0 : i32, i32, i32, i32
  }
  func.func @transform_20(%arg0: i32, %arg1: i32) -> (i32, i32, i32, i32) {
    %c0_i32 = arith.constant 0 : i32
    %c0_i32_0 = arith.constant 0 : i32
    %c0_i32_1 = arith.constant 0 : i32
    return %arg0, %c0_i32, %arg1, %c0_i32_0 : i32, i32, i32, i32
  }
}

</mosaic_0001>

<llo_original>
// kernel: gpt_layer.1
$region0: #{gpt_layer.1}
  #allocation0 [shape = 'u32[]', space=smem, size = 0x4, offset = 0x4, fixed_abs, tag = 'smem constant byte address 0x4 - core index']
  #allocation1 [shape = 'u32[144,128]{1,0:T(1,128)}', space=vmem, size = 0x12000, scoped, tag = 'internal scratch']
  %s0 = inlined_call_operand.vmem [shape: f32[2,8,32], index: 0, kind: input, shape index: {}, may-alias: {0,1}]
  %s1 = inlined_call_operand.vmem [shape: f32[2,8,32], index: 1, kind: input, shape index: {}, may-alias: {0,1}]
  %s2 = inlined_call_operand.vmem [shape: bf16[32,32], index: 2, kind: input, shape index: {}]
  %s3 = inlined_call_operand.vmem [shape: f32[1,32], index: 3, kind: input, shape index: {}]
  %s4 = inlined_call_operand.vmem [shape: bf16[32,32], index: 4, kind: input, shape index: {}]
  %s5 = inlined_call_operand.vmem [shape: f32[1,32], index: 5, kind: input, shape index: {}]
  %s6 = inlined_call_operand.vmem [shape: bf16[32,32], index: 6, kind: input, shape index: {}]
  %s7 = inlined_call_operand.vmem [shape: f32[1,32], index: 7, kind: input, shape index: {}]
  %s8 = inlined_call_operand.vmem [shape: bf16[32,32], index: 8, kind: input, shape index: {}]
  %s9 = inlined_call_operand.vmem [shape: f32[1,32], index: 9, kind: input, shape index: {}]
  %s10 = inlined_call_operand.vmem [shape: bf16[32,64], index: 10, kind: input, shape index: {}]
  %s11 = inlined_call_operand.vmem [shape: f32[1,64], index: 11, kind: input, shape index: {}]
  %s12 = inlined_call_operand.vmem [shape: bf16[64,32], index: 12, kind: input, shape index: {}]
  %s13 = inlined_call_operand.vmem [shape: f32[1,32], index: 13, kind: input, shape index: {}]
  %s14 = inlined_call_operand.vmem [shape: f32[1,32], index: 14, kind: input, shape index: {}]
  %s15 = inlined_call_operand.vmem [shape: f32[1,32], index: 15, kind: input, shape index: {}]
  %s16 = inlined_call_operand.vmem [shape: f32[1,32], index: 16, kind: input, shape index: {}]
  %s17 = inlined_call_operand.vmem [shape: f32[1,32], index: 17, kind: input, shape index: {}]
  %s18 = inlined_call_operand.hbm [shape: f32[2,8,32], index: 18, kind: output, shape index: {0}]
  %s19 = inlined_call_operand.hbm [shape: f32[2,4,8,8], index: 19, kind: output, shape index: {1}]
  %s20 = inlined_call_operand.hbm [shape: f32[2,4,8,8], index: 20, kind: output, shape index: {2}]
  %21 = xla_tuple %s18, %s19, %s20
  %s22 = sld [smem:[#allocation0]]
  $region121: #{gpt_layer.1} parent=0
    _
  %s24 = ssub.s32 1, %s22
  %s25 = scalar_select 0, %s24, %s22
  $region1: #{gpt_layer.1} parent=0
    #allocation2 [shape = 'u8[8192]{0}', space=vmem, size = 0x2000, scoped, tag = 'output window, operand 0']
    #allocation3 [shape = 's32[2]{0}', space=sflag, size = 0x8, scoped, tag = 'scoped memory for gpt_layer.1']
    #allocation4 [shape = 'u8[32768]{0}', space=vmem, size = 0x8000, scoped, tag = 'output window, operand 1']
    #allocation5 [shape = 's32[2]{0}', space=sflag, size = 0x8, scoped, tag = 'scoped memory for gpt_layer.1']
    #allocation6 [shape = 'u8[32768]{0}', space=vmem, size = 0x8000, scoped, tag = 'output window, operand 2']
    %26 = vsyncpa [#allocation3], 0
    %s27 = scalar_lea.sflag [#allocation3], 1
    %28 = vsyncpa %s27, 0
    %29 = vsyncpa [#allocation5], 0
    %s30 = scalar_lea.sflag [#allocation5], 1
    %31 = vsyncpa %s30, 0
    loop: start=0, step=1, limit=4
    $region2: #{gpt_layer.1} parent=1 // loop_pre_header
      _
    $region3: #{gpt_layer.1} parent=1 // loop_header
      %s33 = sphi 0, %s37
      %p34 = scmp.ge.s32.totalorder %s33, 4
      %s40 = sphi 0, %s52
      %s41 = sphi 0, %s48
      %s42 = sphi 0, %s40
      %s43 = sphi 0, %s41
      %s44 = sphi 0, %s42
      %s45 = sphi 0, %s43
      %s57 = sphi 0, %s59
      %s60 = sphi 0, %s57
      %s61 = sphi 0, %s60
      %s77 = sphi 0, %s61
      %s83 = sphi 0, %s85
      %s86 = sphi 0, %s83
      %s87 = sphi 0, %s86
      %s103 = sphi 0, %s87
      %s107 = sphi 0, %s107
      %s109 = sphi 0, %s107
      %s110 = sphi 0, %s109
      %s124 = sphi 0, %s110
      %s128 = sphi 0, %s128
      %s130 = sphi 0, %s128
      %s131 = sphi 0, %s130
      %s145 = sphi 0, %s131
      %s149 = sphi 0, %s149
      %s151 = sphi 0, %s149
      %s152 = sphi 0, %s151
      %s166 = sphi 0, %s152
      %s170 = sphi 0, %s170
      %s172 = sphi 0, %s170
      %s173 = sphi 0, %s172
      %s187 = sphi 0, %s173
      %s191 = sphi 0, %s191
      %s193 = sphi 0, %s191
      %s194 = sphi 0, %s193
      %s208 = sphi 0, %s194
      %s212 = sphi 0, %s212
      %s214 = sphi 0, %s212
      %s215 = sphi 0, %s214
      %s229 = sphi 0, %s215
      %s233 = sphi 0, %s233
      %s235 = sphi 0, %s233
      %s236 = sphi 0, %s235
      %s250 = sphi 0, %s236
      %s254 = sphi 0, %s254
      %s256 = sphi 0, %s254
      %s257 = sphi 0, %s256
      %s271 = sphi 0, %s257
      %s275 = sphi 0, %s275
      %s277 = sphi 0, %s275
      %s278 = sphi 0, %s277
      %s292 = sphi 0, %s278
      %s296 = sphi 0, %s296
      %s298 = sphi 0, %s296
      %s299 = sphi 0, %s298
      %s313 = sphi 0, %s299
      %s317 = sphi 0, %s317
      %s319 = sphi 0, %s317
      %s320 = sphi 0, %s319
      %s334 = sphi 0, %s320
      %s338 = sphi 0, %s338
      %s340 = sphi 0, %s338
      %s341 = sphi 0, %s340
      %s355 = sphi 0, %s341
      %s359 = sphi 0, %s359
      %s361 = sphi 0, %s359
      %s362 = sphi 0, %s361
      %s376 = sphi 0, %s362
      %s380 = sphi 0, %s380
      %s382 = sphi 0, %s380
      %s383 = sphi 0, %s382
      %s397 = sphi 0, %s383
      %s401 = sphi 0, %s401
      %s403 = sphi 0, %s401
      %s404 = sphi 0, %s403
      %s418 = sphi 0, %s404
      %s422 = sphi 0, %s422
      %s424 = sphi 0, %s422
      %s425 = sphi 0, %s424
      %s439 = sphi 0, %s425
      %s447 = sphi 0, %s449
      %s450 = sphi 0, %s447
      %s451 = sphi 0, %s450
      %s467 = sphi 0, %s451
      %s475 = sphi 0, %s477
      %s478 = sphi 0, %s475
      %s479 = sphi 0, %s478
      %s495 = sphi 0, %s479
      %s503 = sphi 0, %s505
      %s506 = sphi 0, %s503
      %s507 = sphi 0, %s506
      %s523 = sphi 0, %s507
    $region4: #{gpt_layer.1} parent=1 // loop_header_branch
      %36 = sbr.rel (%p34) target = $region8
    $region5: #{gpt_layer.1} parent=1 // loop_body
      %s38 = ssub.s32 %s33, 1
      %s39 = ssub.s32 %s33, 2
      %s46 = sadd.s32 1, %s41
      %p47 = scmp.ge.s32.totalorder %s46, 1
      %s48 = scalar_select %p47, 0, %s46
      %s49 = sadd.s32 1, %s40
      %s50 = scalar_select %p47, %s49, %s40
      %p51 = scmp.ge.s32.totalorder %s50, 2
      %s52 = scalar_select %p51, 0, %s50
      %s53 = ssub.s32 %s40, %s52
      %s54 = ssub.s32 %s41, %s48
      %s55 = sor.u32 %s53, %s54
      %p56 = scmp.eq.s32.totalorder %s55, 0
      %s58 = sadd.s32 %s57, 1
      %s59 = scalar_select %p56, %s57, %s58
      %p62 = pneg %p56
      %p63 = scmp.eq.s32.totalorder %s33, 1
      %p64 = por %p62, %p63
      %p65 = scmp.ne.s32.totalorder %s57, %s60
      %p66 = scmp.eq.s32.totalorder %s33, 0
      %p67 = por %p65, %p66
      %p68 = scmp.ne.s32.totalorder %s57, %s60
      %p69 = scmp.eq.s32.totalorder %s38, 1
      %p70 = por %p68, %p69
      %p71 = scmp.ne.s32.totalorder %s60, %s61
      %p72 = scmp.eq.s32.totalorder %s38, 0
      %p73 = por %p71, %p72
      %p74 = scmp.ne.s32.totalorder %s60, %s61
      %p75 = scmp.eq.s32.totalorder %s39, 1
      %p76 = por %p74, %p75
      %p78 = scmp.ne.s32.totalorder %s61, %s77
      %p79 = scmp.eq.s32.totalorder %s39, 0
      %p80 = por %p78, %p79
      %s81 = ssub.s32 %s40, %s52
      %p82 = scmp.eq.s32.totalorder %s81, 0
      %s84 = sadd.s32 %s83, 1
      %s85 = scalar_select %p82, %s83, %s84
      %p88 = pneg %p82
      %p89 = scmp.eq.s32.totalorder %s33, 1
      %p90 = por %p88, %p89
      %p91 = scmp.ne.s32.totalorder %s83, %s86
      %p92 = scmp.eq.s32.totalorder %s33, 0
      %p93 = por %p91, %p92
      %p94 = scmp.ne.s32.totalorder %s83, %s86
      %p95 = scmp.eq.s32.totalorder %s38, 1
      %p96 = por %p94, %p95
      %p97 = scmp.ne.s32.totalorder %s86, %s87
      %p98 = scmp.eq.s32.totalorder %s38, 0
      %p99 = por %p97, %p98
      %p100 = scmp.ne.s32.totalorder %s86, %s87
      %p101 = scmp.eq.s32.totalorder %s39, 1
      %p102 = por %p100, %p101
      %p104 = scmp.ne.s32.totalorder %s87, %s103
      %p105 = scmp.eq.s32.totalorder %s39, 0
      %p106 = por %p104, %p105
      %s108 = sadd.s32 %s107, 1
      %p111 = scmp.eq.s32.totalorder %s33, 1
      %p112 = scmp.ne.s32.totalorder %s107, %s109
      %p113 = scmp.eq.s32.totalorder %s33, 0
      %p114 = por %p112, %p113
      %p115 = scmp.ne.s32.totalorder %s107, %s109
      %p116 = scmp.eq.s32.totalorder %s38, 1
      %p117 = por %p115, %p116
      %p118 = scmp.ne.s32.totalorder %s109, %s110
      %p119 = scmp.eq.s32.totalorder %s38, 0
      %p120 = por %p118, %p119
      %p121 = scmp.ne.s32.totalorder %s109, %s110
      %p122 = scmp.eq.s32.totalorder %s39, 1
      %p123 = por %p121, %p122
      %p125 = scmp.ne.s32.totalorder %s110, %s124
      %p126 = scmp.eq.s32.totalorder %s39, 0
      %p127 = por %p125, %p126
      %s129 = sadd.s32 %s128, 1
      %p132 = scmp.eq.s32.totalorder %s33, 1
      %p133 = scmp.ne.s32.totalorder %s128, %s130
      %p134 = scmp.eq.s32.totalorder %s33, 0
      %p135 = por %p133, %p134
      %p136 = scmp.ne.s32.totalorder %s128, %s130
      %p137 = scmp.eq.s32.totalorder %s38, 1
      %p138 = por %p136, %p137
      %p139 = scmp.ne.s32.totalorder %s130, %s131
      %p140 = scmp.eq.s32.totalorder %s38, 0
      %p141 = por %p139, %p140
      %p142 = scmp.ne.s32.totalorder %s130, %s131
      %p143 = scmp.eq.s32.totalorder %s39, 1
      %p144 = por %p142, %p143
      %p146 = scmp.ne.s32.totalorder %s131, %s145
      %p147 = scmp.eq.s32.totalorder %s39, 0
      %p148 = por %p146, %p147
      %s150 = sadd.s32 %s149, 1
      %p153 = scmp.eq.s32.totalorder %s33, 1
      %p154 = scmp.ne.s32.totalorder %s149, %s151
      %p155 = scmp.eq.s32.totalorder %s33, 0
      %p156 = por %p154, %p155
      %p157 = scmp.ne.s32.totalorder %s149, %s151
      %p158 = scmp.eq.s32.totalorder %s38, 1
      %p159 = por %p157, %p158
      %p160 = scmp.ne.s32.totalorder %s151, %s152
      %p161 = scmp.eq.s32.totalorder %s38, 0
      %p162 = por %p160, %p161
      %p163 = scmp.ne.s32.totalorder %s151, %s152
      %p164 = scmp.eq.s32.totalorder %s39, 1
      %p165 = por %p163, %p164
      %p167 = scmp.ne.s32.totalorder %s152, %s166
      %p168 = scmp.eq.s32.totalorder %s39, 0
      %p169 = por %p167, %p168
      %s171 = sadd.s32 %s170, 1
      %p174 = scmp.eq.s32.totalorder %s33, 1
      %p175 = scmp.ne.s32.totalorder %s170, %s172
      %p176 = scmp.eq.s32.totalorder %s33, 0
      %p177 = por %p175, %p176
      %p178 = scmp.ne.s32.totalorder %s170, %s172
      %p179 = scmp.eq.s32.totalorder %s38, 1
      %p180 = por %p178, %p179
      %p181 = scmp.ne.s32.totalorder %s172, %s173
      %p182 = scmp.eq.s32.totalorder %s38, 0
      %p183 = por %p181, %p182
      %p184 = scmp.ne.s32.totalorder %s172, %s173
      %p185 = scmp.eq.s32.totalorder %s39, 1
      %p186 = por %p184, %p185
      %p188 = scmp.ne.s32.totalorder %s173, %s187
      %p189 = scmp.eq.s32.totalorder %s39, 0
      %p190 = por %p188, %p189
      %s192 = sadd.s32 %s191, 1
      %p195 = scmp.eq.s32.totalorder %s33, 1
      %p196 = scmp.ne.s32.totalorder %s191, %s193
      %p197 = scmp.eq.s32.totalorder %s33, 0
      %p198 = por %p196, %p197
      %p199 = scmp.ne.s32.totalorder %s191, %s193
      %p200 = scmp.eq.s32.totalorder %s38, 1
      %p201 = por %p199, %p200
      %p202 = scmp.ne.s32.totalorder %s193, %s194
      %p203 = scmp.eq.s32.totalorder %s38, 0
      %p204 = por %p202, %p203
      %p205 = scmp.ne.s32.totalorder %s193, %s194
      %p206 = scmp.eq.s32.totalorder %s39, 1
      %p207 = por %p205, %p206
      %p209 = scmp.ne.s32.totalorder %s194, %s208
      %p210 = scmp.eq.s32.totalorder %s39, 0
      %p211 = por %p209, %p210
      %s213 = sadd.s32 %s212, 1
      %p216 = scmp.eq.s32.totalorder %s33, 1
      %p217 = scmp.ne.s32.totalorder %s212, %s214
      %p218 = scmp.eq.s32.totalorder %s33, 0
      %p219 = por %p217, %p218
      %p220 = scmp.ne.s32.totalorder %s212, %s214
      %p221 = scmp.eq.s32.totalorder %s38, 1
      %p222 = por %p220, %p221
      %p223 = scmp.ne.s32.totalorder %s214, %s215
      %p224 = scmp.eq.s32.totalorder %s38, 0
      %p225 = por %p223, %p224
      %p226 = scmp.ne.s32.totalorder %s214, %s215
      %p227 = scmp.eq.s32.totalorder %s39, 1
      %p228 = por %p226, %p227
      %p230 = scmp.ne.s32.totalorder %s215, %s229
      %p231 = scmp.eq.s32.totalorder %s39, 0
      %p232 = por %p230, %p231
      %s234 = sadd.s32 %s233, 1
      %p237 = scmp.eq.s32.totalorder %s33, 1
      %p238 = scmp.ne.s32.totalorder %s233, %s235
      %p239 = scmp.eq.s32.totalorder %s33, 0
      %p240 = por %p238, %p239
      %p241 = scmp.ne.s32.totalorder %s233, %s235
      %p242 = scmp.eq.s32.totalorder %s38, 1
      %p243 = por %p241, %p242
      %p244 = scmp.ne.s32.totalorder %s235, %s236
      %p245 = scmp.eq.s32.totalorder %s38, 0
      %p246 = por %p244, %p245
      %p247 = scmp.ne.s32.totalorder %s235, %s236
      %p248 = scmp.eq.s32.totalorder %s39, 1
      %p249 = por %p247, %p248
      %p251 = scmp.ne.s32.totalorder %s236, %s250
      %p252 = scmp.eq.s32.totalorder %s39, 0
      %p253 = por %p251, %p252
      %s255 = sadd.s32 %s254, 1
      %p258 = scmp.eq.s32.totalorder %s33, 1
      %p259 = scmp.ne.s32.totalorder %s254, %s256
      %p260 = scmp.eq.s32.totalorder %s33, 0
      %p261 = por %p259, %p260
      %p262 = scmp.ne.s32.totalorder %s254, %s256
      %p263 = scmp.eq.s32.totalorder %s38, 1
      %p264 = por %p262, %p263
      %p265 = scmp.ne.s32.totalorder %s256, %s257
      %p266 = scmp.eq.s32.totalorder %s38, 0
      %p267 = por %p265, %p266
      %p268 = scmp.ne.s32.totalorder %s256, %s257
      %p269 = scmp.eq.s32.totalorder %s39, 1
      %p270 = por %p268, %p269
      %p272 = scmp.ne.s32.totalorder %s257, %s271
      %p273 = scmp.eq.s32.totalorder %s39, 0
      %p274 = por %p272, %p273
      %s276 = sadd.s32 %s275, 1
      %p279 = scmp.eq.s32.totalorder %s33, 1
      %p280 = scmp.ne.s32.totalorder %s275, %s277
      %p281 = scmp.eq.s32.totalorder %s33, 0
      %p282 = por %p280, %p281
      %p283 = scmp.ne.s32.totalorder %s275, %s277
      %p284 = scmp.eq.s32.totalorder %s38, 1
      %p285 = por %p283, %p284
      %p286 = scmp.ne.s32.totalorder %s277, %s278
      %p287 = scmp.eq.s32.totalorder %s38, 0
      %p288 = por %p286, %p287
      %p289 = scmp.ne.s32.totalorder %s277, %s278
      %p290 = scmp.eq.s32.totalorder %s39, 1
      %p291 = por %p289, %p290
      %p293 = scmp.ne.s32.totalorder %s278, %s292
      %p294 = scmp.eq.s32.totalorder %s39, 0
      %p295 = por %p293, %p294
      %s297 = sadd.s32 %s296, 1
      %p300 = scmp.eq.s32.totalorder %s33, 1
      %p301 = scmp.ne.s32.totalorder %s296, %s298
      %p302 = scmp.eq.s32.totalorder %s33, 0
      %p303 = por %p301, %p302
      %p304 = scmp.ne.s32.totalorder %s296, %s298
      %p305 = scmp.eq.s32.totalorder %s38, 1
      %p306 = por %p304, %p305
      %p307 = scmp.ne.s32.totalorder %s298, %s299
      %p308 = scmp.eq.s32.totalorder %s38, 0
      %p309 = por %p307, %p308
      %p310 = scmp.ne.s32.totalorder %s298, %s299
      %p311 = scmp.eq.s32.totalorder %s39, 1
      %p312 = por %p310, %p311
      %p314 = scmp.ne.s32.totalorder %s299, %s313
      %p315 = scmp.eq.s32.totalorder %s39, 0
      %p316 = por %p314, %p315
      %s318 = sadd.s32 %s317, 1
      %p321 = scmp.eq.s32.totalorder %s33, 1
      %p322 = scmp.ne.s32.totalorder %s317, %s319
      %p323 = scmp.eq.s32.totalorder %s33, 0
      %p324 = por %p322, %p323
      %p325 = scmp.ne.s32.totalorder %s317, %s319
      %p326 = scmp.eq.s32.totalorder %s38, 1
      %p327 = por %p325, %p326
      %p328 = scmp.ne.s32.totalorder %s319, %s320
      %p329 = scmp.eq.s32.totalorder %s38, 0
      %p330 = por %p328, %p329
      %p331 = scmp.ne.s32.totalorder %s319, %s320
      %p332 = scmp.eq.s32.totalorder %s39, 1
      %p333 = por %p331, %p332
      %p335 = scmp.ne.s32.totalorder %s320, %s334
      %p336 = scmp.eq.s32.totalorder %s39, 0
      %p337 = por %p335, %p336
      %s339 = sadd.s32 %s338, 1
      %p342 = scmp.eq.s32.totalorder %s33, 1
      %p343 = scmp.ne.s32.totalorder %s338, %s340
      %p344 = scmp.eq.s32.totalorder %s33, 0
      %p345 = por %p343, %p344
      %p346 = scmp.ne.s32.totalorder %s338, %s340
      %p347 = scmp.eq.s32.totalorder %s38, 1
      %p348 = por %p346, %p347
      %p349 = scmp.ne.s32.totalorder %s340, %s341
      %p350 = scmp.eq.s32.totalorder %s38, 0
      %p351 = por %p349, %p350
      %p352 = scmp.ne.s32.totalorder %s340, %s341
      %p353 = scmp.eq.s32.totalorder %s39, 1
      %p354 = por %p352, %p353
      %p356 = scmp.ne.s32.totalorder %s341, %s355
      %p357 = scmp.eq.s32.totalorder %s39, 0
      %p358 = por %p356, %p357
      %s360 = sadd.s32 %s359, 1
      %p363 = scmp.eq.s32.totalorder %s33, 1
      %p364 = scmp.ne.s32.totalorder %s359, %s361
      %p365 = scmp.eq.s32.totalorder %s33, 0
      %p366 = por %p364, %p365
      %p367 = scmp.ne.s32.totalorder %s359, %s361
      %p368 = scmp.eq.s32.totalorder %s38, 1
      %p369 = por %p367, %p368
      %p370 = scmp.ne.s32.totalorder %s361, %s362
      %p371 = scmp.eq.s32.totalorder %s38, 0
      %p372 = por %p370, %p371
      %p373 = scmp.ne.s32.totalorder %s361, %s362
      %p374 = scmp.eq.s32.totalorder %s39, 1
      %p375 = por %p373, %p374
      %p377 = scmp.ne.s32.totalorder %s362, %s376
      %p378 = scmp.eq.s32.totalorder %s39, 0
      %p379 = por %p377, %p378
      %s381 = sadd.s32 %s380, 1
      %p384 = scmp.eq.s32.totalorder %s33, 1
      %p385 = scmp.ne.s32.totalorder %s380, %s382
      %p386 = scmp.eq.s32.totalorder %s33, 0
      %p387 = por %p385, %p386
      %p388 = scmp.ne.s32.totalorder %s380, %s382
      %p389 = scmp.eq.s32.totalorder %s38, 1
      %p390 = por %p388, %p389
      %p391 = scmp.ne.s32.totalorder %s382, %s383
      %p392 = scmp.eq.s32.totalorder %s38, 0
      %p393 = por %p391, %p392
      %p394 = scmp.ne.s32.totalorder %s382, %s383
      %p395 = scmp.eq.s32.totalorder %s39, 1
      %p396 = por %p394, %p395
      %p398 = scmp.ne.s32.totalorder %s383, %s397
      %p399 = scmp.eq.s32.totalorder %s39, 0
      %p400 = por %p398, %p399
      %s402 = sadd.s32 %s401, 1
      %p405 = scmp.eq.s32.totalorder %s33, 1
      %p406 = scmp.ne.s32.totalorder %s401, %s403
      %p407 = scmp.eq.s32.totalorder %s33, 0
      %p408 = por %p406, %p407
      %p409 = scmp.ne.s32.totalorder %s401, %s403
      %p410 = scmp.eq.s32.totalorder %s38, 1
      %p411 = por %p409, %p410
      %p412 = scmp.ne.s32.totalorder %s403, %s404
      %p413 = scmp.eq.s32.totalorder %s38, 0
      %p414 = por %p412, %p413
      %p415 = scmp.ne.s32.totalorder %s403, %s404
      %p416 = scmp.eq.s32.totalorder %s39, 1
      %p417 = por %p415, %p416
      %p419 = scmp.ne.s32.totalorder %s404, %s418
      %p420 = scmp.eq.s32.totalorder %s39, 0
      %p421 = por %p419, %p420
      %s423 = sadd.s32 %s422, 1
      %p426 = scmp.eq.s32.totalorder %s33, 1
      %p427 = scmp.ne.s32.totalorder %s422, %s424
      %p428 = scmp.eq.s32.totalorder %s33, 0
      %p429 = por %p427, %p428
      %p430 = scmp.ne.s32.totalorder %s422, %s424
      %p431 = scmp.eq.s32.totalorder %s38, 1
      %p432 = por %p430, %p431
      %p433 = scmp.ne.s32.totalorder %s424, %s425
      %p434 = scmp.eq.s32.totalorder %s38, 0
      %p435 = por %p433, %p434
      %p436 = scmp.ne.s32.totalorder %s424, %s425
      %p437 = scmp.eq.s32.totalorder %s39, 1
      %p438 = por %p436, %p437
      %p440 = scmp.ne.s32.totalorder %s425, %s439
      %p441 = scmp.eq.s32.totalorder %s39, 0
      %p442 = por %p440, %p441
      %s443 = ssub.s32 %s40, %s52
      %s444 = ssub.s32 %s41, %s48
      %s445 = sor.u32 %s443, %s444
      %p446 = scmp.eq.s32.totalorder %s445, 0
      %s448 = sadd.s32 %s447, 1
      %s449 = scalar_select %p446, %s447, %s448
      %p452 = pneg %p446
      %p453 = scmp.eq.s32.totalorder %s33, 1
      %p454 = por %p452, %p453
      %p455 = scmp.ne.s32.totalorder %s447, %s450
      %p456 = scmp.eq.s32.totalorder %s33, 0
      %p457 = por %p455, %p456
      %p458 = scmp.ne.s32.totalorder %s447, %s450
      %p459 = scmp.eq.s32.totalorder %s38, 1
      %p460 = por %p458, %p459
      %p461 = scmp.ne.s32.totalorder %s450, %s451
      %p462 = scmp.eq.s32.totalorder %s38, 0
      %p463 = por %p461, %p462
      %p464 = scmp.ne.s32.totalorder %s450, %s451
      %p465 = scmp.eq.s32.totalorder %s39, 1
      %p466 = por %p464, %p465
      %p468 = scmp.ne.s32.totalorder %s451, %s467
      %p469 = scmp.eq.s32.totalorder %s39, 0
      %p470 = por %p468, %p469
      %s471 = ssub.s32 %s40, %s52
      %s472 = ssub.s32 %s41, %s48
      %s473 = sor.u32 %s471, %s472
      %p474 = scmp.eq.s32.totalorder %s473, 0
      %s476 = sadd.s32 %s475, 1
      %s477 = scalar_select %p474, %s475, %s476
      %p480 = pneg %p474
      %p481 = scmp.eq.s32.totalorder %s33, 1
      %p482 = por %p480, %p481
      %p483 = scmp.ne.s32.totalorder %s475, %s478
      %p484 = scmp.eq.s32.totalorder %s33, 0
      %p485 = por %p483, %p484
      %p486 = scmp.ne.s32.totalorder %s475, %s478
      %p487 = scmp.eq.s32.totalorder %s38, 1
      %p488 = por %p486, %p487
      %p489 = scmp.ne.s32.totalorder %s478, %s479
      %p490 = scmp.eq.s32.totalorder %s38, 0
      %p491 = por %p489, %p490
      %p492 = scmp.ne.s32.totalorder %s478, %s479
      %p493 = scmp.eq.s32.totalorder %s39, 1
      %p494 = por %p492, %p493
      %p496 = scmp.ne.s32.totalorder %s479, %s495
      %p497 = scmp.eq.s32.totalorder %s39, 0
      %p498 = por %p496, %p497
      %s499 = ssub.s32 %s40, %s52
      %s500 = ssub.s32 %s41, %s48
      %s501 = sor.u32 %s499, %s500
      %p502 = scmp.eq.s32.totalorder %s501, 0
      %s504 = sadd.s32 %s503, 1
      %s505 = scalar_select %p502, %s503, %s504
      %p508 = pneg %p502
      %p509 = scmp.eq.s32.totalorder %s33, 1
      %p510 = por %p508, %p509
      %p511 = scmp.ne.s32.totalorder %s503, %s506
      %p512 = scmp.eq.s32.totalorder %s33, 0
      %p513 = por %p511, %p512
      %p514 = scmp.ne.s32.totalorder %s503, %s506
      %p515 = scmp.eq.s32.totalorder %s38, 1
      %p516 = por %p514, %p515
      %p517 = scmp.ne.s32.totalorder %s506, %s507
      %p518 = scmp.eq.s32.totalorder %s38, 0
      %p519 = por %p517, %p518
      %p520 = scmp.ne.s32.totalorder %s506, %s507
      %p521 = scmp.eq.s32.totalorder %s39, 1
      %p522 = por %p520, %p521
      %p524 = scmp.ne.s32.totalorder %s507, %s523
      %p525 = scmp.eq.s32.totalorder %s39, 0
      %p526 = por %p524, %p525
      %p527 = scmp.le.s32.totalorder 1, %s33
      %p528 = scmp.lt.s32.totalorder %s33, 3
      %p529 = pnand %p527, %p528
      %p530 = pneg %p529
      // Predicated region
      $region9: #{gpt_layer.1} parent=5 // pred_check
        _
      $region10: #{gpt_layer.1} parent=5 // pred_check_branch
        %532 = sbr.rel (%p529) target = $region12
      $region11: #{gpt_layer.1} parent=5 // pred_region
        %s533 = ssub.s32 %s33, 1
        // Predicated region
        $region13: #{gpt_layer.1} parent=11 // pred_check
          %p534 = pneg %p120
        $region14: #{gpt_layer.1} parent=11 // pred_check_branch
          %536 = sbr.rel (%p534) target = $region16
        $region15: #{gpt_layer.1} parent=11 // pred_region
          _
        $region16: #{gpt_layer.1} parent=11 // pred_fallthru
          _
        // Predicated region
        $region17: #{gpt_layer.1} parent=11 // pred_check
          %p537 = pneg %p141
        $region18: #{gpt_layer.1} parent=11 // pred_check_branch
          %539 = sbr.rel (%p537) target = $region20
        $region19: #{gpt_layer.1} parent=11 // pred_region
          _
        $region20: #{gpt_layer.1} parent=11 // pred_fallthru
          _
        // Predicated region
        $region21: #{gpt_layer.1} parent=11 // pred_check
          %p540 = pneg %p162
        $region22: #{gpt_layer.1} parent=11 // pred_check_branch
          %542 = sbr.rel (%p540) target = $region24
        $region23: #{gpt_layer.1} parent=11 // pred_region
          _
        $region24: #{gpt_layer.1} parent=11 // pred_fallthru
          _
        // Predicated region
        $region25: #{gpt_layer.1} parent=11 // pred_check
          %p543 = pneg %p183
        $region26: #{gpt_layer.1} parent=11 // pred_check_branch
          %545 = sbr.rel (%p543) target = $region28
        $region27: #{gpt_layer.1} parent=11 // pred_region
          _
        $region28: #{gpt_layer.1} parent=11 // pred_fallthru
          _
        // Predicated region
        $region29: #{gpt_layer.1} parent=11 // pred_check
          %p546 = pneg %p204
        $region30: #{gpt_layer.1} parent=11 // pred_check_branch
          %548 = sbr.rel (%p546) target = $region32
        $region31: #{gpt_layer.1} parent=11 // pred_region
          _
        $region32: #{gpt_layer.1} parent=11 // pred_fallthru
          _
        // Predicated region
        $region33: #{gpt_layer.1} parent=11 // pred_check
          %p549 = pneg %p225
        $region34: #{gpt_layer.1} parent=11 // pred_check_branch
          %551 = sbr.rel (%p549) target = $region36
        $region35: #{gpt_layer.1} parent=11 // pred_region
          _
        $region36: #{gpt_layer.1} parent=11 // pred_fallthru
          _
        // Predicated region
        $region37: #{gpt_layer.1} parent=11 // pred_check
          %p552 = pneg %p246
        $region38: #{gpt_layer.1} parent=11 // pred_check_branch
          %554 = sbr.rel (%p552) target = $region40
        $region39: #{gpt_layer.1} parent=11 // pred_region
          _
        $region40: #{gpt_layer.1} parent=11 // pred_fallthru
          _
        // Predicated region
        $region41: #{gpt_layer.1} parent=11 // pred_check
          %p555 = pneg %p267
        $region42: #{gpt_layer.1} parent=11 // pred_check_branch
          %557 = sbr.rel (%p555) target = $region44
        $region43: #{gpt_layer.1} parent=11 // pred_region
          _
        $region44: #{gpt_layer.1} parent=11 // pred_fallthru
          _
        // Predicated region
        $region45: #{gpt_layer.1} parent=11 // pred_check
          %p558 = pneg %p288
        $region46: #{gpt_layer.1} parent=11 // pred_check_branch
          %560 = sbr.rel (%p558) target = $region48
        $region47: #{gpt_layer.1} parent=11 // pred_region
          _
        $region48: #{gpt_layer.1} parent=11 // pred_fallthru
          _
        // Predicated region
        $region49: #{gpt_layer.1} parent=11 // pred_check
          %p561 = pneg %p309
        $region50: #{gpt_layer.1} parent=11 // pred_check_branch
          %563 = sbr.rel (%p561) target = $region52
        $region51: #{gpt_layer.1} parent=11 // pred_region
          _
        $region52: #{gpt_layer.1} parent=11 // pred_fallthru
          _
        // Predicated region
        $region53: #{gpt_layer.1} parent=11 // pred_check
          %p564 = pneg %p330
        $region54: #{gpt_layer.1} parent=11 // pred_check_branch
          %566 = sbr.rel (%p564) target = $region56
        $region55: #{gpt_layer.1} parent=11 // pred_region
          _
        $region56: #{gpt_layer.1} parent=11 // pred_fallthru
          _
        // Predicated region
        $region57: #{gpt_layer.1} parent=11 // pred_check
          %p567 = pneg %p351
        $region58: #{gpt_layer.1} parent=11 // pred_check_branch
          %569 = sbr.rel (%p567) target = $region60
        $region59: #{gpt_layer.1} parent=11 // pred_region
          _
        $region60: #{gpt_layer.1} parent=11 // pred_fallthru
          _
        // Predicated region
        $region61: #{gpt_layer.1} parent=11 // pred_check
          %p570 = pneg %p372
        $region62: #{gpt_layer.1} parent=11 // pred_check_branch
          %572 = sbr.rel (%p570) target = $region64
        $region63: #{gpt_layer.1} parent=11 // pred_region
          _
        $region64: #{gpt_layer.1} parent=11 // pred_fallthru
          _
        // Predicated region
        $region65: #{gpt_layer.1} parent=11 // pred_check
          %p573 = pneg %p393
        $region66: #{gpt_layer.1} parent=11 // pred_check_branch
          %575 = sbr.rel (%p573) target = $region68
        $region67: #{gpt_layer.1} parent=11 // pred_region
          _
        $region68: #{gpt_layer.1} parent=11 // pred_fallthru
          _
        // Predicated region
        $region69: #{gpt_layer.1} parent=11 // pred_check
          %p576 = pneg %p414
        $region70: #{gpt_layer.1} parent=11 // pred_check_branch
          %578 = sbr.rel (%p576) target = $region72
        $region71: #{gpt_layer.1} parent=11 // pred_region
          _
        $region72: #{gpt_layer.1} parent=11 // pred_fallthru
          _
        // Predicated region
        $region73: #{gpt_layer.1} parent=11 // pred_check
          %p579 = pneg %p435
        $region74: #{gpt_layer.1} parent=11 // pred_check_branch
          %581 = sbr.rel (%p579) target = $region76
        $region75: #{gpt_layer.1} parent=11 // pred_region
          _
        $region76: #{gpt_layer.1} parent=11 // pred_fallthru
          _
      $region12: #{gpt_layer.1} parent=5 // pred_fallthru
        _
      %p582 = scmp.lt.s32.totalorder %s33, 2
      // Predicated region
      $region77: #{gpt_layer.1} parent=5 // pred_check
        %p583 = pneg %p582
      $region78: #{gpt_layer.1} parent=5 // pred_check_branch
        %585 = sbr.rel (%p583) target = $region80
      $region79: #{gpt_layer.1} parent=5 // pred_region
        // Predicated region
        $region81: #{gpt_layer.1} parent=79 // pred_check
          %p586 = pneg %p67
        $region82: #{gpt_layer.1} parent=79 // pred_check_branch
          %588 = sbr.rel (%p586) target = $region84
        $region83: #{gpt_layer.1} parent=79 // pred_region
          %p589 = scmp.lt.s32.totalorder %s40, 1
          %s590 = scalar_select %p589, %s40, 1
          %p591 = scmp.lt.s32.totalorder %s41, 0
          %s592 = scalar_select %p591, %s41, 0
          %s593 = sadd.s32 %s592, %s590
          %s594 = smul.addr %s593, 8
          %s595 = scalar_lea.vmem %s0, %s594
        $region84: #{gpt_layer.1} parent=79 // pred_fallthru
          _
        // Predicated region
        $region85: #{gpt_layer.1} parent=79 // pred_check
          %p596 = pneg %p93
        $region86: #{gpt_layer.1} parent=79 // pred_check_branch
          %598 = sbr.rel (%p596) target = $region88
        $region87: #{gpt_layer.1} parent=79 // pred_region
          %p599 = scmp.lt.s32.totalorder %s40, 1
          %s600 = scalar_select %p599, %s40, 1
          %s601 = smul.addr %s600, 8
          %s602 = scalar_lea.vmem %s1, %s601
        $region88: #{gpt_layer.1} parent=79 // pred_fallthru
          _
      $region80: #{gpt_layer.1} parent=5 // pred_fallthru
        _
      %p603 = scmp.le.s32.totalorder 1, %s33
      %p604 = scmp.lt.s32.totalorder %s33, 3
      %p605 = pnand %p603, %p604
      %p606 = pneg %p605
      // Predicated region
      $region89: #{gpt_layer.1} parent=5 // pred_check
        _
      $region90: #{gpt_layer.1} parent=5 // pred_check_branch
        %608 = sbr.rel (%p605) target = $region92
      $region91: #{gpt_layer.1} parent=5 // pred_region
        %s609 = ssub.s32 %s33, 1
        %p610 = scmp.lt.s32.totalorder %s42, 1
        %s611 = scalar_select %p610, %s42, 1
        %p612 = scmp.lt.s32.totalorder %s43, 0
        %s613 = scalar_select %p612, %s43, 0
        %s614 = sadd.s32 %s613, %s611
        %s615 = smul.addr %s614, 8
        %s616 = scalar_lea.vmem %s0, %s615
        %p617 = pneg %p73
        %p618 = pneg %p70
        %p619 = scmp.lt.s32.totalorder %s42, 1
        %s620 = scalar_select %p619, %s42, 1
        %s621 = smul.addr %s620, 8
        %s622 = scalar_lea.vmem %s1, %s621
        %p623 = pneg %p99
        %p624 = pneg %p96
        %p625 = pneg %p120
        %p626 = pneg %p117
        %p627 = pneg %p141
        %p628 = pneg %p138
        %p629 = pneg %p162
        %p630 = pneg %p159
        %p631 = pneg %p183
        %p632 = pneg %p180
        %p633 = pneg %p204
        %p634 = pneg %p201
        %p635 = pneg %p225
        %p636 = pneg %p222
        %p637 = pneg %p246
        %p638 = pneg %p243
        %p639 = pneg %p267
        %p640 = pneg %p264
        %p641 = pneg %p288
        %p642 = pneg %p285
        %p643 = pneg %p309
        %p644 = pneg %p306
        %p645 = pneg %p330
        %p646 = pneg %p327
        %p647 = pneg %p351
        %p648 = pneg %p348
        %p649 = pneg %p372
        %p650 = pneg %p369
        %p651 = pneg %p393
        %p652 = pneg %p390
        %p653 = pneg %p414
        %p654 = pneg %p411
        %p655 = pneg %p435
        %p656 = pneg %p432
        %p657 = pneg %p463
        %p658 = pneg %p460
        %s659 = sand.u32 %s450, 1
        %s660 = scalar_lea.sflag [#allocation3], %s659
        %s661 = sand.u32 %s450, 1
        %s662 = smul.addr %s661, 8
        %s663 = scalar_lea.vmem [#allocation2], %s662
        %p664 = pneg %p491
        %p665 = pneg %p488
        %s666 = sand.u32 %s38, 1
        %s667 = scalar_lea.sflag [#allocation5], %s666
        %s668 = sand.u32 %s478, 1
        %s669 = smul.addr %s668, 32
        %s670 = scalar_lea.vmem [#allocation4], %s669
        %p671 = pneg %p519
        %p672 = pneg %p516
        %s673 = sand.u32 %s38, 1
        %s674 = scalar_lea.sflag [#allocation5], %s673
        %s675 = sand.u32 %s506, 1
        %s676 = smul.addr %s675, 32
        %s677 = scalar_lea.vmem [#allocation6], %s676
        %p678 = scmp.lt.s32.totalorder %s42, 1
        %s679 = scalar_select %p678, %s42, 1
        %p680 = scmp.lt.s32.totalorder %s43, 0
        %s681 = scalar_select %p680, %s43, 0
        %s682 = sadd.s32 %s681, %s679
        %s683 = smul.addr %s682, 8
        %s684 = scalar_lea.vmem %s0, %s683
        %p685 = scmp.lt.s32.totalorder %s42, 1
        %s686 = scalar_select %p685, %s42, 1
        %s687 = smul.addr %s686, 8
        %s688 = scalar_lea.vmem %s1, %s687
        %v690 = vld [vmem:[%s684] sm:$0xff]
        %v691 = vld [vmem:[%s688] sm:$0xff]
        %v692 = vpack.c.bf16 %v691, %v691
        %v693 = vpack.c.bf16 %v690, %v690
        %v694 = vld [vmem:[%s3] sm:$0x1]
        %v695 = vld [vmem:[%s5] sm:$0x1]
        %v696 = vld [vmem:[%s7] sm:$0x1]
        %v697 = vld [vmem:[%s9] sm:$0x1]
        %v698 = vld [vmem:[%s11] sm:$0x1]
        %v699 = vld [vmem:[%s13] sm:$0x1]
        %v700 = vld [vmem:[%s14] sm:$0x1]
        %v701 = vld [vmem:[%s15] sm:$0x1]
        %v702 = vld [vmem:[%s16] sm:$0x1]
        %v703 = vld [vmem:[%s17] sm:$0x1]
        %v704 = vld [vmem:[%s8] sm:$0xf]
        %v705 = vld [vmem:[%s8 + $0x4] sm:$0xf]
        %v706 = vld [vmem:[%s8 + $0x8] sm:$0xf]
        %v707 = vld [vmem:[%s8 + $0xc] sm:$0xf]
        %v708 = vld [vmem:[%s2] sm:$0xf]
        %v709 = vld [vmem:[%s2 + $0x4] sm:$0xf]
        %v710 = vld [vmem:[%s2 + $0x8] sm:$0xf]
        %v711 = vld [vmem:[%s2 + $0xc] sm:$0xf]
        %v713 = vlaneseq
        %v714 = vshrl.u32 %v713, 7
        %v715 = vsub.s32 0, %v714
        %v716 = vrot.slane %v694, %v715
        %v722 = vunpack.c.l.b16 %v708
        %v723 = vunpack.c.l.b16 %v709
        %v724 = vunpack.c.l.b16 %v710
        %v725 = vunpack.c.l.b16 %v711
        %v726 = vpack.c.b16 %v723, %v722
        %v727 = vpack.c.b16 %v725, %v724
        %vm730 = vcmask 261120
        %v732 = vsel %vm730, %v693, 0
        %734 = vmatprep.subr.bf16.mxu0 0
        %735 = vmatpush1.bf16.msra.mxu0 %v726
        %736 = vmatprep.subr.bf16.mxu0 0
        %737 = vmatpush1.bf16.msra.mxu0 %v727
        %738 = vmatprep.subr.bf16.mxu0 0
        %739 = vmatpush1.bf16.msra.mxu0 0
        %740 = vmatprep.subr.bf16.mxu0 0
        %741 = vmatpush1.bf16.msra.mxu0 0
        %742 = vmatprep.subr.bf16.mxu0 0
        %743 = vmatpush1.bf16.msra.mxu0 0
        %744 = vmatprep.subr.bf16.mxu0 0
        %745 = vmatpush1.bf16.msra.mxu0 0
        %746 = vmatprep.subr.bf16.mxu0 0
        %747 = vmatpush1.bf16.msra.mxu0 0
        %748 = vmatprep.subr.bf16.mxu0 0
        %749 = vmatpush1.bf16.msra.mxu0 0
        %750 = vmatprep.subr.bf16.mxu0 0
        %751 = vmatpush1.bf16.msra.mxu0 0
        %752 = vmatprep.subr.bf16.mxu0 0
        %753 = vmatpush1.bf16.msra.mxu0 0
        %754 = vmatprep.subr.bf16.mxu0 0
        %755 = vmatpush1.bf16.msra.mxu0 0
        %756 = vmatprep.subr.bf16.mxu0 0
        %757 = vmatpush1.bf16.msra.mxu0 0
        %758 = vmatprep.subr.bf16.mxu0 0
        %759 = vmatpush1.bf16.msra.mxu0 0
        %760 = vmatprep.subr.bf16.mxu0 0
        %761 = vmatpush1.bf16.msra.mxu0 0
        %762 = vmatprep.subr.bf16.mxu0 0
        %763 = vmatpush1.bf16.msra.mxu0 0
        %764 = vmatprep.subr.bf16.mxu0 0
        %765 = vmatpush1.bf16.msra.mxu0 0
        %766 = vmatprep.mubr.bf16.mxu0 0
        %767 = vmatmul.mubr.bf16.gmra.mrb[0].mxu0 %v732
        %v768 = vpop.f32.mrb[0].mxu0
        %v769 = vadd.f32 %v716, %v768
        %v770 = vpop.f32.mrb[0].mxu0
        %v771 = vpop.f32.mrb[0].mxu0
        %v772 = vpop.f32.mrb[0].mxu0
        %773 = vdwg.mxu0
        %v774 = vld [vmem:[%s4] sm:$0xf]
        %v775 = vld [vmem:[%s4 + $0x4] sm:$0xf]
        %v776 = vld [vmem:[%s4 + $0x8] sm:$0xf]
        %v777 = vld [vmem:[%s4 + $0xc] sm:$0xf]
        %v779 = vlaneseq
        %v780 = vshrl.u32 %v779, 7
        %v781 = vsub.s32 0, %v780
        %v782 = vrot.slane %v695, %v781
        %v788 = vunpack.c.l.b16 %v774
        %v789 = vunpack.c.l.b16 %v775
        %v790 = vunpack.c.l.b16 %v776
        %v791 = vunpack.c.l.b16 %v777
        %v792 = vpack.c.b16 %v789, %v788
        %v793 = vpack.c.b16 %v791, %v790
        %v797 = vsel %vm730, %v692, 0
        %799 = vmatprep.subr.bf16.mxu0 0
        %800 = vmatpush1.bf16.msra.mxu0 %v792
        %801 = vmatprep.subr.bf16.mxu0 0
        %802 = vmatpush1.bf16.msra.mxu0 %v793
        %803 = vmatprep.subr.bf16.mxu0 0
        %804 = vmatpush1.bf16.msra.mxu0 0
        %805 = vmatprep.subr.bf16.mxu0 0
        %806 = vmatpush1.bf16.msra.mxu0 0
        %807 = vmatprep.subr.bf16.mxu0 0
        %808 = vmatpush1.bf16.msra.mxu0 0
        %809 = vmatprep.subr.bf16.mxu0 0
        %810 = vmatpush1.bf16.msra.mxu0 0
        %811 = vmatprep.subr.bf16.mxu0 0
        %812 = vmatpush1.bf16.msra.mxu0 0
        %813 = vmatprep.subr.bf16.mxu0 0
        %814 = vmatpush1.bf16.msra.mxu0 0
        %815 = vmatprep.subr.bf16.mxu0 0
        %816 = vmatpush1.bf16.msra.mxu0 0
        %817 = vmatprep.subr.bf16.mxu0 0
        %818 = vmatpush1.bf16.msra.mxu0 0
        %819 = vmatprep.subr.bf16.mxu0 0
        %820 = vmatpush1.bf16.msra.mxu0 0
        %821 = vmatprep.subr.bf16.mxu0 0
        %822 = vmatpush1.bf16.msra.mxu0 0
        %823 = vmatprep.subr.bf16.mxu0 0
        %824 = vmatpush1.bf16.msra.mxu0 0
        %825 = vmatprep.subr.bf16.mxu0 0
        %826 = vmatpush1.bf16.msra.mxu0 0
        %827 = vmatprep.subr.bf16.mxu0 0
        %828 = vmatpush1.bf16.msra.mxu0 0
        %829 = vmatprep.subr.bf16.mxu0 0
        %830 = vmatpush1.bf16.msra.mxu0 0
        %831 = vmatprep.mubr.bf16.mxu0 0
        %832 = vmatmul.mubr.bf16.gmra.mrb[0].mxu0 %v797
        %v833 = vpop.f32.mrb[0].mxu0
        %v834 = vadd.f32 %v782, %v833
        %v835 = vpop.f32.mrb[0].mxu0
        %v836 = vpop.f32.mrb[0].mxu0
        %v837 = vpop.f32.mrb[0].mxu0
        %838 = vdwg.mxu0
        %v839 = vld [vmem:[%s6] sm:$0xf]
        %v840 = vld [vmem:[%s6 + $0x4] sm:$0xf]
        %v841 = vld [vmem:[%s6 + $0x8] sm:$0xf]
        %v842 = vld [vmem:[%s6 + $0xc] sm:$0xf]
        %v844 = vlaneseq
        %v845 = vshrl.u32 %v844, 7
        %v846 = vsub.s32 0, %v845
        %v847 = vrot.slane %v696, %v846
        %v853 = vunpack.c.l.b16 %v839
        %v854 = vunpack.c.l.b16 %v840
        %v855 = vunpack.c.l.b16 %v841
        %v856 = vunpack.c.l.b16 %v842
        %v857 = vpack.c.b16 %v854, %v853
        %v858 = vpack.c.b16 %v856, %v855
        %861 = vmatprep.subr.bf16.mxu0 0
        %862 = vmatpush1.bf16.msra.mxu0 %v857
        %863 = vmatprep.subr.bf16.mxu0 0
        %864 = vmatpush1.bf16.msra.mxu0 %v858
        %865 = vmatprep.subr.bf16.mxu0 0
        %866 = vmatpush1.bf16.msra.mxu0 0
        %867 = vmatprep.subr.bf16.mxu0 0
        %868 = vmatpush1.bf16.msra.mxu0 0
        %869 = vmatprep.subr.bf16.mxu0 0
        %870 = vmatpush1.bf16.msra.mxu0 0
        %871 = vmatprep.subr.bf16.mxu0 0
        %872 = vmatpush1.bf16.msra.mxu0 0
        %873 = vmatprep.subr.bf16.mxu0 0
        %874 = vmatpush1.bf16.msra.mxu0 0
        %875 = vmatprep.subr.bf16.mxu0 0
        %876 = vmatpush1.bf16.msra.mxu0 0
        %877 = vmatprep.subr.bf16.mxu0 0
        %878 = vmatpush1.bf16.msra.mxu0 0
        %879 = vmatprep.subr.bf16.mxu0 0
        %880 = vmatpush1.bf16.msra.mxu0 0
        %881 = vmatprep.subr.bf16.mxu0 0
        %882 = vmatpush1.bf16.msra.mxu0 0
        %883 = vmatprep.subr.bf16.mxu0 0
        %884 = vmatpush1.bf16.msra.mxu0 0
        %885 = vmatprep.subr.bf16.mxu0 0
        %886 = vmatpush1.bf16.msra.mxu0 0
        %887 = vmatprep.subr.bf16.mxu0 0
        %888 = vmatpush1.bf16.msra.mxu0 0
        %889 = vmatprep.subr.bf16.mxu0 0
        %890 = vmatpush1.bf16.msra.mxu0 0
        %891 = vmatprep.subr.bf16.mxu0 0
        %892 = vmatpush1.bf16.msra.mxu0 0
        %893 = vmatprep.mubr.bf16.mxu0 0
        %894 = vmatmul.mubr.bf16.gmra.mrb[0].mxu0 %v797
        %v895 = vpop.f32.mrb[0].mxu0
        %v896 = vadd.f32 %v847, %v895
        %v897 = vpop.f32.mrb[0].mxu0
        %v898 = vpop.f32.mrb[0].mxu0
        %v899 = vpop.f32.mrb[0].mxu0
        %900 = vdwg.mxu0
        %v901 = vpack.c.bf16 %v769, %v769
        %v902 = vpack.c.bf16 %v834, %v834
        %v903 = vpack.c.bf16 %v896, %v896
        %s904 = smul.u32 %s43, 8
        %v905 = vlaneseq
        %v906 = vshrl.u32 %v905, 7
        %v907 = vstv %s904
        %v908 = vadd.s32 %v907, %v906
        %v909 = vlaneseq
        %v910 = vand.u32 %v909, 127
        %vm911 = vcmp.ge.s32.totalorder %v908, %v910
        %vm912 = vcmask 64512
        %v914 = vsel %vm912, %v901, 0
        %v917 = vsel %vm912, %v902, 0
        %919 = vmatprep.subr.bf16.mxu0 0
        %920 = vmatpush1.bf16.xpose.msra.mxu0 %v917
        %921 = vmatprep.subr.bf16.mxu0 0
        %922 = vmatpush1.bf16.xpose.msra.mxu0 0
        %923 = vmatprep.subr.bf16.mxu0 0
        %924 = vmatpush1.bf16.xpose.msra.mxu0 0
        %925 = vmatprep.subr.bf16.mxu0 0
        %926 = vmatpush1.bf16.xpose.msra.mxu0 0
        %927 = vmatprep.subr.bf16.mxu0 0
        %928 = vmatpush1.bf16.xpose.msra.mxu0 0
        %929 = vmatprep.subr.bf16.mxu0 0
        %930 = vmatpush1.bf16.xpose.msra.mxu0 0
        %931 = vmatprep.subr.bf16.mxu0 0
        %932 = vmatpush1.bf16.xpose.msra.mxu0 0
        %933 = vmatprep.subr.bf16.mxu0 0
        %934 = vmatpush1.bf16.xpose.msra.mxu0 0
        %935 = vmatprep.subr.bf16.mxu0 0
        %936 = vmatpush1.bf16.xpose.msra.mxu0 0
        %937 = vmatprep.subr.bf16.mxu0 0
        %938 = vmatpush1.bf16.xpose.msra.mxu0 0
        %939 = vmatprep.subr.bf16.mxu0 0
        %940 = vmatpush1.bf16.xpose.msra.mxu0 0
        %941 = vmatprep.subr.bf16.mxu0 0
        %942 = vmatpush1.bf16.xpose.msra.mxu0 0
        %943 = vmatprep.subr.bf16.mxu0 0
        %944 = vmatpush1.bf16.xpose.msra.mxu0 0
        %945 = vmatprep.subr.bf16.mxu0 0
        %946 = vmatpush1.bf16.xpose.msra.mxu0 0
        %947 = vmatprep.subr.bf16.mxu0 0
        %948 = vmatpush1.bf16.xpose.msra.mxu0 0
        %949 = vmatprep.subr.bf16.mxu0 0
        %950 = vmatpush1.bf16.xpose.msra.mxu0 0
        %951 = vmatprep.mubr.bf16.mxu0 0
        %952 = vmatmul.mubr.bf16.gmra.mrb[0].mxu0 %v914
        %v953 = vpop.f32.mrb[0].mxu0
        %v954 = vadd.f32 0.0, %v953
        %v955 = vpop.f32.mrb[0].mxu0
        %v956 = vpop.f32.mrb[0].mxu0
        %v957 = vpop.f32.mrb[0].mxu0
        %958 = vdwg.mxu0
        %v959 = vmul.f32 %v954, 0.35355338
        %v960 = vsel %vm911, %v959, -1e+09
        %v961 = vsel %vm912, %v960, -inf
        %962 = vmax.xlane.f32.xlu0 %v961
        %v963 = vpop.xlane.xlu0 %962
        %v964 = vsub.f32 %v960, %v963
        %v965 = vmul.f32 %v964, 1.442695
        %v966 = vpow.pop %v965
        %v967 = vsel %vm912, %v966, 0.0
        %968 = vadd.xlane.f32.xlu0 %v967
        %v969 = vpop.xlane.xlu0 %968
        %v970 = vrcp.pop %v969
        %v971 = vmul.f32 %v966, %v970
        %v972 = vpack.c.bf16 %v971, %v971
        %v974 = vsel %vm912, %v972, 0
        %vm976 = vcmask 1043456
        %v978 = vsel %vm976, %v903, 0
        %980 = vmatprep.subr.bf16.mxu0 0
        %981 = vmatpush1.bf16.msra.mxu0 %v978
        %982 = vmatprep.subr.bf16.mxu0 0
        %983 = vmatpush1.bf16.msra.mxu0 0
        %984 = vmatprep.subr.bf16.mxu0 0
        %985 = vmatpush1.bf16.msra.mxu0 0
        %986 = vmatprep.subr.bf16.mxu0 0
        %987 = vmatpush1.bf16.msra.mxu0 0
        %988 = vmatprep.subr.bf16.mxu0 0
        %989 = vmatpush1.bf16.msra.mxu0 0
        %990 = vmatprep.subr.bf16.mxu0 0
        %991 = vmatpush1.bf16.msra.mxu0 0
        %992 = vmatprep.subr.bf16.mxu0 0
        %993 = vmatpush1.bf16.msra.mxu0 0
        %994 = vmatprep.subr.bf16.mxu0 0
        %995 = vmatpush1.bf16.msra.mxu0 0
        %996 = vmatprep.subr.bf16.mxu0 0
        %997 = vmatpush1.bf16.msra.mxu0 0
        %998 = vmatprep.subr.bf16.mxu0 0
        %999 = vmatpush1.bf16.msra.mxu0 0
        %1000 = vmatprep.subr.bf16.mxu0 0
        %1001 = vmatpush1.bf16.msra.mxu0 0
        %1002 = vmatprep.subr.bf16.mxu0 0
        %1003 = vmatpush1.bf16.msra.mxu0 0
        %1004 = vmatprep.subr.bf16.mxu0 0
        %1005 = vmatpush1.bf16.msra.mxu0 0
        %1006 = vmatprep.subr.bf16.mxu0 0
        %1007 = vmatpush1.bf16.msra.mxu0 0
        %1008 = vmatprep.subr.bf16.mxu0 0
        %1009 = vmatpush1.bf16.msra.mxu0 0
        %1010 = vmatprep.subr.bf16.mxu0 0
        %1011 = vmatpush1.bf16.msra.mxu0 0
        %1012 = vmatprep.mubr.bf16.mxu0 0
        %1013 = vmatmul.mubr.bf16.gmra.mrb[0].mxu0 %v974
        %v1014 = vpop.f32.mrb[0].mxu0
        %v1015 = vadd.f32 0.0, %v1014
        %v1016 = vpop.f32.mrb[0].mxu0
        %v1017 = vpop.f32.mrb[0].mxu0
        %v1018 = vpop.f32.mrb[0].mxu0
        %1019 = vdwg.mxu0
        %v1020 = vpack.c.bf16 %v1015, %v1015
        %1021 = vst.msk [vmem:[%s670] sm:$0xff] %vm912, %v834
        %1022 = vst.msk [vmem:[%s677] sm:$0xff] %vm912, %v896
        %1024 = vrot.lane.b32.xlu0 %v901, 120
        %v1025 = vpop.permute.xlu0 %1024
        %1027 = vrot.lane.b32.xlu0 %v902, 120
        %v1028 = vpop.permute.xlu0 %1027
        %v1030 = vsel %vm912, %v1025, 0
        %v1033 = vsel %vm912, %v1028, 0
        %1035 = vmatprep.subr.bf16.mxu0 0
        %1036 = vmatpush1.bf16.xpose.msra.mxu0 %v1033
        %1037 = vmatprep.subr.bf16.mxu0 0
        %1038 = vmatpush1.bf16.xpose.msra.mxu0 0
        %1039 = vmatprep.subr.bf16.mxu0 0
        %1040 = vmatpush1.bf16.xpose.msra.mxu0 0
        %1041 = vmatprep.subr.bf16.mxu0 0
        %1042 = vmatpush1.bf16.xpose.msra.mxu0 0
        %1043 = vmatprep.subr.bf16.mxu0 0
        %1044 = vmatpush1.bf16.xpose.msra.mxu0 0
        %1045 = vmatprep.subr.bf16.mxu0 0
        %1046 = vmatpush1.bf16.xpose.msra.mxu0 0
        %1047 = vmatprep.subr.bf16.mxu0 0
        %1048 = vmatpush1.bf16.xpose.msra.mxu0 0
        %1049 = vmatprep.subr.bf16.mxu0 0
        %1050 = vmatpush1.bf16.xpose.msra.mxu0 0
        %1051 = vmatprep.subr.bf16.mxu0 0
        %1052 = vmatpush1.bf16.xpose.msra.mxu0 0
        %1053 = vmatprep.subr.bf16.mxu0 0
        %1054 = vmatpush1.bf16.xpose.msra.mxu0 0
        %1055 = vmatprep.subr.bf16.mxu0 0
        %1056 = vmatpush1.bf16.xpose.msra.mxu0 0
        %1057 = vmatprep.subr.bf16.mxu0 0
        %1058 = vmatpush1.bf16.xpose.msra.mxu0 0
        %1059 = vmatprep.subr.bf16.mxu0 0
        %1060 = vmatpush1.bf16.xpose.msra.mxu0 0
        %1061 = vmatprep.subr.bf16.mxu0 0
        %1062 = vmatpush1.bf16.xpose.msra.mxu0 0
        %1063 = vmatprep.subr.bf16.mxu0 0
        %1064 = vmatpush1.bf16.xpose.msra.mxu0 0
        %1065 = vmatprep.subr.bf16.mxu0 0
        %1066 = vmatpush1.bf16.xpose.msra.mxu0 0
        %1067 = vmatprep.mubr.bf16.mxu0 0
        %1068 = vmatmul.mubr.bf16.gmra.mrb[0].mxu0 %v1030
        %v1069 = vpop.f32.mrb[0].mxu0
        %v1070 = vadd.f32 0.0, %v1069
        %v1071 = vpop.f32.mrb[0].mxu0
        %v1072 = vpop.f32.mrb[0].mxu0
        %v1073 = vpop.f32.mrb[0].mxu0
        %1074 = vdwg.mxu0
        %v1075 = vmul.f32 %v1070, 0.35355338
        %v1076 = vsel %vm911, %v1075, -1e+09
        %v1077 = vsel %vm912, %v1076, -inf
        %1078 = vmax.xlane.f32.xlu0 %v1077
        %v1079 = vpop.xlane.xlu0 %1078
        %v1080 = vsub.f32 %v1076, %v1079
        %v1081 = vmul.f32 %v1080, 1.442695
        %v1082 = vpow.pop %v1081
        %v1083 = vsel %vm912, %v1082, 0.0
        %1084 = vadd.xlane.f32.xlu0 %v1083
        %v1085 = vpop.xlane.xlu0 %1084
        %v1086 = vrcp.pop %v1085
        %v1087 = vmul.f32 %v1082, %v1086
        %v1088 = vpack.c.bf16 %v1087, %v1087
        %1090 = vrot.lane.b32.xlu0 %v903, 120
        %v1091 = vpop.permute.xlu0 %1090
        %v1093 = vsel %vm912, %v1088, 0
        %v1096 = vsel %vm976, %v1091, 0
        %1098 = vmatprep.subr.bf16.mxu0 0
        %1099 = vmatpush1.bf16.msra.mxu0 %v1096
        %1100 = vmatprep.subr.bf16.mxu0 0
        %1101 = vmatpush1.bf16.msra.mxu0 0
        %1102 = vmatprep.subr.bf16.mxu0 0
        %1103 = vmatpush1.bf16.msra.mxu0 0
        %1104 = vmatprep.subr.bf16.mxu0 0
        %1105 = vmatpush1.bf16.msra.mxu0 0
        %1106 = vmatprep.subr.bf16.mxu0 0
        %1107 = vmatpush1.bf16.msra.mxu0 0
        %1108 = vmatprep.subr.bf16.mxu0 0
        %1109 = vmatpush1.bf16.msra.mxu0 0
        %1110 = vmatprep.subr.bf16.mxu0 0
        %1111 = vmatpush1.bf16.msra.mxu0 0
        %1112 = vmatprep.subr.bf16.mxu0 0
        %1113 = vmatpush1.bf16.msra.mxu0 0
        %1114 = vmatprep.subr.bf16.mxu0 0
        %1115 = vmatpush1.bf16.msra.mxu0 0
        %1116 = vmatprep.subr.bf16.mxu0 0
        %1117 = vmatpush1.bf16.msra.mxu0 0
        %1118 = vmatprep.subr.bf16.mxu0 0
        %1119 = vmatpush1.bf16.msra.mxu0 0
        %1120 = vmatprep.subr.bf16.mxu0 0
        %1121 = vmatpush1.bf16.msra.mxu0 0
        %1122 = vmatprep.subr.bf16.mxu0 0
        %1123 = vmatpush1.bf16.msra.mxu0 0
        %1124 = vmatprep.subr.bf16.mxu0 0
        %1125 = vmatpush1.bf16.msra.mxu0 0
        %1126 = vmatprep.subr.bf16.mxu0 0
        %1127 = vmatpush1.bf16.msra.mxu0 0
        %1128 = vmatprep.subr.bf16.mxu0 0
        %1129 = vmatpush1.bf16.msra.mxu0 0
        %1130 = vmatprep.mubr.bf16.mxu0 0
        %1131 = vmatmul.mubr.bf16.gmra.mrb[0].mxu0 %v1093
        %v1132 = vpop.f32.mrb[0].mxu0
        %v1133 = vadd.f32 0.0, %v1132
        %v1134 = vpop.f32.mrb[0].mxu0
        %v1135 = vpop.f32.mrb[0].mxu0
        %v1136 = vpop.f32.mrb[0].mxu0
        %1137 = vdwg.mxu0
        %v1138 = vpack.c.bf16 %v1133, %v1133
        %v1140 = vsel %vm912, %v1138, 0
        %v1143 = vsel %vm976, %v705, 0
        %1145 = vmatprep.subr.bf16.mxu0 0
        %1146 = vmatpush1.bf16.msra.mxu0 %v1143
        %1147 = vmatprep.subr.bf16.mxu0 0
        %1148 = vmatpush1.bf16.msra.mxu0 0
        %1149 = vmatprep.subr.bf16.mxu0 0
        %1150 = vmatpush1.bf16.msra.mxu0 0
        %1151 = vmatprep.subr.bf16.mxu0 0
        %1152 = vmatpush1.bf16.msra.mxu0 0
        %1153 = vmatprep.subr.bf16.mxu0 0
        %1154 = vmatpush1.bf16.msra.mxu0 0
        %1155 = vmatprep.subr.bf16.mxu0 0
        %1156 = vmatpush1.bf16.msra.mxu0 0
        %1157 = vmatprep.subr.bf16.mxu0 0
        %1158 = vmatpush1.bf16.msra.mxu0 0
        %1159 = vmatprep.subr.bf16.mxu0 0
        %1160 = vmatpush1.bf16.msra.mxu0 0
        %1161 = vmatprep.subr.bf16.mxu0 0
        %1162 = vmatpush1.bf16.msra.mxu0 0
        %1163 = vmatprep.subr.bf16.mxu0 0
        %1164 = vmatpush1.bf16.msra.mxu0 0
        %1165 = vmatprep.subr.bf16.mxu0 0
        %1166 = vmatpush1.bf16.msra.mxu0 0
        %1167 = vmatprep.subr.bf16.mxu0 0
        %1168 = vmatpush1.bf16.msra.mxu0 0
        %1169 = vmatprep.subr.bf16.mxu0 0
        %1170 = vmatpush1.bf16.msra.mxu0 0
        %1171 = vmatprep.subr.bf16.mxu0 0
        %1172 = vmatpush1.bf16.msra.mxu0 0
        %1173 = vmatprep.subr.bf16.mxu0 0
        %1174 = vmatpush1.bf16.msra.mxu0 0
        %1175 = vmatprep.subr.bf16.mxu0 0
        %1176 = vmatpush1.bf16.msra.mxu0 0
        %1177 = vmatprep.mubr.bf16.mxu0 0
        %1178 = vmatmul.mubr.bf16.gmra.mrb[0].mxu0 %v1140
        %v1179 = vpop.f32.mrb[0].mxu0
        %v1180 = vadd.f32 0.0, %v1179
        %v1181 = vpop.f32.mrb[0].mxu0
        %v1182 = vpop.f32.mrb[0].mxu0
        %v1183 = vpop.f32.mrb[0].mxu0
        %1184 = vdwg.mxu0
        %v1186 = vsel %vm912, %v1020, 0
        %v1189 = vsel %vm976, %v704, 0
        %1191 = vmatprep.subr.bf16.mxu0 0
        %1192 = vmatpush1.bf16.msra.mxu0 %v1189
        %1193 = vmatprep.subr.bf16.mxu0 0
        %1194 = vmatpush1.bf16.msra.mxu0 0
        %1195 = vmatprep.subr.bf16.mxu0 0
        %1196 = vmatpush1.bf16.msra.mxu0 0
        %1197 = vmatprep.subr.bf16.mxu0 0
        %1198 = vmatpush1.bf16.msra.mxu0 0
        %1199 = vmatprep.subr.bf16.mxu0 0
        %1200 = vmatpush1.bf16.msra.mxu0 0
        %1201 = vmatprep.subr.bf16.mxu0 0
        %1202 = vmatpush1.bf16.msra.mxu0 0
        %1203 = vmatprep.subr.bf16.mxu0 0
        %1204 = vmatpush1.bf16.msra.mxu0 0
        %1205 = vmatprep.subr.bf16.mxu0 0
        %1206 = vmatpush1.bf16.msra.mxu0 0
        %1207 = vmatprep.subr.bf16.mxu0 0
        %1208 = vmatpush1.bf16.msra.mxu0 0
        %1209 = vmatprep.subr.bf16.mxu0 0
        %1210 = vmatpush1.bf16.msra.mxu0 0
        %1211 = vmatprep.subr.bf16.mxu0 0
        %1212 = vmatpush1.bf16.msra.mxu0 0
        %1213 = vmatprep.subr.bf16.mxu0 0
        %1214 = vmatpush1.bf16.msra.mxu0 0
        %1215 = vmatprep.subr.bf16.mxu0 0
        %1216 = vmatpush1.bf16.msra.mxu0 0
        %1217 = vmatprep.subr.bf16.mxu0 0
        %1218 = vmatpush1.bf16.msra.mxu0 0
        %1219 = vmatprep.subr.bf16.mxu0 0
        %1220 = vmatpush1.bf16.msra.mxu0 0
        %1221 = vmatprep.subr.bf16.mxu0 0
        %1222 = vmatpush1.bf16.msra.mxu0 0
        %1223 = vmatprep.mubr.bf16.mxu0 0
        %1224 = vmatmul.mubr.bf16.gmra.mrb[0].mxu0 %v1186
        %v1225 = vpop.f32.mrb[0].mxu0
        %v1226 = vadd.f32 %v1180, %v1225
        %v1227 = vpop.f32.mrb[0].mxu0
        %v1228 = vpop.f32.mrb[0].mxu0
        %v1229 = vpop.f32.mrb[0].mxu0
        %1230 = vdwg.mxu0
        %1232 = vrot.lane.b32.xlu0 %v834, 120
        %v1233 = vpop.permute.xlu0 %1232
        %s1235 = scalar_lea.vmem %s670, 8 [#allocation4]
        %1236 = vst.msk [vmem:[%s1235] sm:$0xff] %vm912, %v1233
        %1238 = vrot.lane.b32.xlu0 %v896, 120
        %v1239 = vpop.permute.xlu0 %1238
        %s1241 = scalar_lea.vmem %s677, 8 [#allocation6]
        %1242 = vst.msk [vmem:[%s1241] sm:$0xff] %vm912, %v1239
        %1243 = vrot.lane.b32.xlu0 %v901, 112
        %v1244 = vpop.permute.xlu0 %1243
        %1245 = vrot.lane.b32.xlu0 %v902, 112
        %v1246 = vpop.permute.xlu0 %1245
        %v1248 = vsel %vm912, %v1244, 0
        %v1251 = vsel %vm912, %v1246, 0
        %1253 = vmatprep.subr.bf16.mxu0 0
        %1254 = vmatpush1.bf16.xpose.msra.mxu0 %v1251
        %1255 = vmatprep.subr.bf16.mxu0 0
        %1256 = vmatpush1.bf16.xpose.msra.mxu0 0
        %1257 = vmatprep.subr.bf16.mxu0 0
        %1258 = vmatpush1.bf16.xpose.msra.mxu0 0
        %1259 = vmatprep.subr.bf16.mxu0 0
        %1260 = vmatpush1.bf16.xpose.msra.mxu0 0
        %1261 = vmatprep.subr.bf16.mxu0 0
        %1262 = vmatpush1.bf16.xpose.msra.mxu0 0
        %1263 = vmatprep.subr.bf16.mxu0 0
        %1264 = vmatpush1.bf16.xpose.msra.mxu0 0
        %1265 = vmatprep.subr.bf16.mxu0 0
        %1266 = vmatpush1.bf16.xpose.msra.mxu0 0
        %1267 = vmatprep.subr.bf16.mxu0 0
        %1268 = vmatpush1.bf16.xpose.msra.mxu0 0
        %1269 = vmatprep.subr.bf16.mxu0 0
        %1270 = vmatpush1.bf16.xpose.msra.mxu0 0
        %1271 = vmatprep.subr.bf16.mxu0 0
        %1272 = vmatpush1.bf16.xpose.msra.mxu0 0
        %1273 = vmatprep.subr.bf16.mxu0 0
        %1274 = vmatpush1.bf16.xpose.msra.mxu0 0
        %1275 = vmatprep.subr.bf16.mxu0 0
        %1276 = vmatpush1.bf16.xpose.msra.mxu0 0
        %1277 = vmatprep.subr.bf16.mxu0 0
        %1278 = vmatpush1.bf16.xpose.msra.mxu0 0
        %1279 = vmatprep.subr.bf16.mxu0 0
        %1280 = vmatpush1.bf16.xpose.msra.mxu0 0
        %1281 = vmatprep.subr.bf16.mxu0 0
        %1282 = vmatpush1.bf16.xpose.msra.mxu0 0
        %1283 = vmatprep.subr.bf16.mxu0 0
        %1284 = vmatpush1.bf16.xpose.msra.mxu0 0
        %1285 = vmatprep.mubr.bf16.mxu0 0
        %1286 = vmatmul.mubr.bf16.gmra.mrb[0].mxu0 %v1248
        %v1287 = vpop.f32.mrb[0].mxu0
        %v1288 = vadd.f32 0.0, %v1287
        %v1289 = vpop.f32.mrb[0].mxu0
        %v1290 = vpop.f32.mrb[0].mxu0
        %v1291 = vpop.f32.mrb[0].mxu0
        %1292 = vdwg.mxu0
        %v1293 = vmul.f32 %v1288, 0.35355338
        %v1294 = vsel %vm911, %v1293, -1e+09
        %v1295 = vsel %vm912, %v1294, -inf
        %1296 = vmax.xlane.f32.xlu0 %v1295
        %v1297 = vpop.xlane.xlu0 %1296
        %v1298 = vsub.f32 %v1294, %v1297
        %v1299 = vmul.f32 %v1298, 1.442695
        %v1300 = vpow.pop %v1299
        %v1301 = vsel %vm912, %v1300, 0.0
        %1302 = vadd.xlane.f32.xlu0 %v1301
        %v1303 = vpop.xlane.xlu0 %1302
        %v1304 = vrcp.pop %v1303
        %v1305 = vmul.f32 %v1300, %v1304
        %v1306 = vpack.c.bf16 %v1305, %v1305
        %1307 = vrot.lane.b32.xlu0 %v903, 112
        %v1308 = vpop.permute.xlu0 %1307
        %v1310 = vsel %vm912, %v1306, 0
        %v1313 = vsel %vm976, %v1308, 0
        %1315 = vmatprep.subr.bf16.mxu0 0
        %1316 = vmatpush1.bf16.msra.mxu0 %v1313
        %1317 = vmatprep.subr.bf16.mxu0 0
        %1318 = vmatpush1.bf16.msra.mxu0 0
        %1319 = vmatprep.subr.bf16.mxu0 0
        %1320 = vmatpush1.bf16.msra.mxu0 0
        %1321 = vmatprep.subr.bf16.mxu0 0
        %1322 = vmatpush1.bf16.msra.mxu0 0
        %1323 = vmatprep.subr.bf16.mxu0 0
        %1324 = vmatpush1.bf16.msra.mxu0 0
        %1325 = vmatprep.subr.bf16.mxu0 0
        %1326 = vmatpush1.bf16.msra.mxu0 0
        %1327 = vmatprep.subr.bf16.mxu0 0
        %1328 = vmatpush1.bf16.msra.mxu0 0
        %1329 = vmatprep.subr.bf16.mxu0 0
        %1330 = vmatpush1.bf16.msra.mxu0 0
        %1331 = vmatprep.subr.bf16.mxu0 0
        %1332 = vmatpush1.bf16.msra.mxu0 0
        %1333 = vmatprep.subr.bf16.mxu0 0
        %1334 = vmatpush1.bf16.msra.mxu0 0
        %1335 = vmatprep.subr.bf16.mxu0 0
        %1336 = vmatpush1.bf16.msra.mxu0 0
        %1337 = vmatprep.subr.bf16.mxu0 0
        %1338 = vmatpush1.bf16.msra.mxu0 0
        %1339 = vmatprep.subr.bf16.mxu0 0
        %1340 = vmatpush1.bf16.msra.mxu0 0
        %1341 = vmatprep.subr.bf16.mxu0 0
        %1342 = vmatpush1.bf16.msra.mxu0 0
        %1343 = vmatprep.subr.bf16.mxu0 0
        %1344 = vmatpush1.bf16.msra.mxu0 0
        %1345 = vmatprep.subr.bf16.mxu0 0
        %1346 = vmatpush1.bf16.msra.mxu0 0
        %1347 = vmatprep.mubr.bf16.mxu0 0
        %1348 = vmatmul.mubr.bf16.gmra.mrb[0].mxu0 %v1310
        %v1349 = vpop.f32.mrb[0].mxu0
        %v1350 = vadd.f32 0.0, %v1349
        %v1351 = vpop.f32.mrb[0].mxu0
        %v1352 = vpop.f32.mrb[0].mxu0
        %v1353 = vpop.f32.mrb[0].mxu0
        %1354 = vdwg.mxu0
        %v1355 = vpack.c.bf16 %v1350, %v1350
        %v1357 = vsel %vm912, %v1355, 0
        %v1360 = vsel %vm976, %v706, 0
        %1362 = vmatprep.subr.bf16.mxu0 0
        %1363 = vmatpush1.bf16.msra.mxu0 %v1360
        %1364 = vmatprep.subr.bf16.mxu0 0
        %1365 = vmatpush1.bf16.msra.mxu0 0
        %1366 = vmatprep.subr.bf16.mxu0 0
        %1367 = vmatpush1.bf16.msra.mxu0 0
        %1368 = vmatprep.subr.bf16.mxu0 0
        %1369 = vmatpush1.bf16.msra.mxu0 0
        %1370 = vmatprep.subr.bf16.mxu0 0
        %1371 = vmatpush1.bf16.msra.mxu0 0
        %1372 = vmatprep.subr.bf16.mxu0 0
        %1373 = vmatpush1.bf16.msra.mxu0 0
        %1374 = vmatprep.subr.bf16.mxu0 0
        %1375 = vmatpush1.bf16.msra.mxu0 0
        %1376 = vmatprep.subr.bf16.mxu0 0
        %1377 = vmatpush1.bf16.msra.mxu0 0
        %1378 = vmatprep.subr.bf16.mxu0 0
        %1379 = vmatpush1.bf16.msra.mxu0 0
        %1380 = vmatprep.subr.bf16.mxu0 0
        %1381 = vmatpush1.bf16.msra.mxu0 0
        %1382 = vmatprep.subr.bf16.mxu0 0
        %1383 = vmatpush1.bf16.msra.mxu0 0
        %1384 = vmatprep.subr.bf16.mxu0 0
        %1385 = vmatpush1.bf16.msra.mxu0 0
        %1386 = vmatprep.subr.bf16.mxu0 0
        %1387 = vmatpush1.bf16.msra.mxu0 0
        %1388 = vmatprep.subr.bf16.mxu0 0
        %1389 = vmatpush1.bf16.msra.mxu0 0
        %1390 = vmatprep.subr.bf16.mxu0 0
        %1391 = vmatpush1.bf16.msra.mxu0 0
        %1392 = vmatprep.subr.bf16.mxu0 0
        %1393 = vmatpush1.bf16.msra.mxu0 0
        %1394 = vmatprep.mubr.bf16.mxu0 0
        %1395 = vmatmul.mubr.bf16.gmra.mrb[0].mxu0 %v1357
        %v1396 = vpop.f32.mrb[0].mxu0
        %v1397 = vadd.f32 0.0, %v1396
        %v1398 = vpop.f32.mrb[0].mxu0
        %v1399 = vpop.f32.mrb[0].mxu0
        %v1400 = vpop.f32.mrb[0].mxu0
        %1401 = vdwg.mxu0
        %v1402 = vadd.f32 %v1226, %v1397
        %1403 = vrot.lane.b32.xlu0 %v834, 112
        %v1404 = vpop.permute.xlu0 %1403
        %s1406 = scalar_lea.vmem %s670, 16 [#allocation4]
        %1407 = vst.msk [vmem:[%s1406] sm:$0xff] %vm912, %v1404
        %1408 = vrot.lane.b32.xlu0 %v896, 112
        %v1409 = vpop.permute.xlu0 %1408
        %s1411 = scalar_lea.vmem %s677, 16 [#allocation6]
        %1412 = vst.msk [vmem:[%s1411] sm:$0xff] %vm912, %v1409
        %1413 = vrot.lane.b32.xlu0 %v901, 104
        %v1414 = vpop.permute.xlu0 %1413
        %1415 = vrot.lane.b32.xlu0 %v902, 104
        %v1416 = vpop.permute.xlu0 %1415
        %v1418 = vsel %vm912, %v1414, 0
        %v1421 = vsel %vm912, %v1416, 0
        %1423 = vmatprep.subr.bf16.mxu0 0
        %1424 = vmatpush1.bf16.xpose.msra.mxu0 %v1421
        %1425 = vmatprep.subr.bf16.mxu0 0
        %1426 = vmatpush1.bf16.xpose.msra.mxu0 0
        %1427 = vmatprep.subr.bf16.mxu0 0
        %1428 = vmatpush1.bf16.xpose.msra.mxu0 0
        %1429 = vmatprep.subr.bf16.mxu0 0
        %1430 = vmatpush1.bf16.xpose.msra.mxu0 0
        %1431 = vmatprep.subr.bf16.mxu0 0
        %1432 = vmatpush1.bf16.xpose.msra.mxu0 0
        %1433 = vmatprep.subr.bf16.mxu0 0
        %1434 = vmatpush1.bf16.xpose.msra.mxu0 0
        %1435 = vmatprep.subr.bf16.mxu0 0
        %1436 = vmatpush1.bf16.xpose.msra.mxu0 0
        %1437 = vmatprep.subr.bf16.mxu0 0
        %1438 = vmatpush1.bf16.xpose.msra.mxu0 0
        %1439 = vmatprep.subr.bf16.mxu0 0
        %1440 = vmatpush1.bf16.xpose.msra.mxu0 0
        %1441 = vmatprep.subr.bf16.mxu0 0
        %1442 = vmatpush1.bf16.xpose.msra.mxu0 0
        %1443 = vmatprep.subr.bf16.mxu0 0
        %1444 = vmatpush1.bf16.xpose.msra.mxu0 0
        %1445 = vmatprep.subr.bf16.mxu0 0
        %1446 = vmatpush1.bf16.xpose.msra.mxu0 0
        %1447 = vmatprep.subr.bf16.mxu0 0
        %1448 = vmatpush1.bf16.xpose.msra.mxu0 0
        %1449 = vmatprep.subr.bf16.mxu0 0
        %1450 = vmatpush1.bf16.xpose.msra.mxu0 0
        %1451 = vmatprep.subr.bf16.mxu0 0
        %1452 = vmatpush1.bf16.xpose.msra.mxu0 0
        %1453 = vmatprep.subr.bf16.mxu0 0
        %1454 = vmatpush1.bf16.xpose.msra.mxu0 0
        %1455 = vmatprep.mubr.bf16.mxu0 0
        %1456 = vmatmul.mubr.bf16.gmra.mrb[0].mxu0 %v1418
        %v1457 = vpop.f32.mrb[0].mxu0
        %v1458 = vadd.f32 0.0, %v1457
        %v1459 = vpop.f32.mrb[0].mxu0
        %v1460 = vpop.f32.mrb[0].mxu0
        %v1461 = vpop.f32.mrb[0].mxu0
        %1462 = vdwg.mxu0
        %v1463 = vmul.f32 %v1458, 0.35355338
        %v1464 = vsel %vm911, %v1463, -1e+09
        %v1465 = vsel %vm912, %v1464, -inf
        %1466 = vmax.xlane.f32.xlu0 %v1465
        %v1467 = vpop.xlane.xlu0 %1466
        %v1468 = vsub.f32 %v1464, %v1467
        %v1469 = vmul.f32 %v1468, 1.442695
        %v1470 = vpow.pop %v1469
        %v1471 = vsel %vm912, %v1470, 0.0
        %1472 = vadd.xlane.f32.xlu0 %v1471
        %v1473 = vpop.xlane.xlu0 %1472
        %v1474 = vrcp.pop %v1473
        %v1475 = vmul.f32 %v1470, %v1474
        %v1476 = vpack.c.bf16 %v1475, %v1475
        %1477 = vrot.lane.b32.xlu0 %v903, 104
        %v1478 = vpop.permute.xlu0 %1477
        %v1480 = vsel %vm912, %v1476, 0
        %v1483 = vsel %vm976, %v1478, 0
        %1485 = vmatprep.subr.bf16.mxu0 0
        %1486 = vmatpush1.bf16.msra.mxu0 %v1483
        %1487 = vmatprep.subr.bf16.mxu0 0
        %1488 = vmatpush1.bf16.msra.mxu0 0
        %1489 = vmatprep.subr.bf16.mxu0 0
        %1490 = vmatpush1.bf16.msra.mxu0 0
        %1491 = vmatprep.subr.bf16.mxu0 0
        %1492 = vmatpush1.bf16.msra.mxu0 0
        %1493 = vmatprep.subr.bf16.mxu0 0
        %1494 = vmatpush1.bf16.msra.mxu0 0
        %1495 = vmatprep.subr.bf16.mxu0 0
        %1496 = vmatpush1.bf16.msra.mxu0 0
        %1497 = vmatprep.subr.bf16.mxu0 0
        %1498 = vmatpush1.bf16.msra.mxu0 0
        %1499 = vmatprep.subr.bf16.mxu0 0
        %1500 = vmatpush1.bf16.msra.mxu0 0
        %1501 = vmatprep.subr.bf16.mxu0 0
        %1502 = vmatpush1.bf16.msra.mxu0 0
        %1503 = vmatprep.subr.bf16.mxu0 0
        %1504 = vmatpush1.bf16.msra.mxu0 0
        %1505 = vmatprep.subr.bf16.mxu0 0
        %1506 = vmatpush1.bf16.msra.mxu0 0
        %1507 = vmatprep.subr.bf16.mxu0 0
        %1508 = vmatpush1.bf16.msra.mxu0 0
        %1509 = vmatprep.subr.bf16.mxu0 0
        %1510 = vmatpush1.bf16.msra.mxu0 0
        %1511 = vmatprep.subr.bf16.mxu0 0
        %1512 = vmatpush1.bf16.msra.mxu0 0
        %1513 = vmatprep.subr.bf16.mxu0 0
        %1514 = vmatpush1.bf16.msra.mxu0 0
        %1515 = vmatprep.subr.bf16.mxu0 0
        %1516 = vmatpush1.bf16.msra.mxu0 0
        %1517 = vmatprep.mubr.bf16.mxu0 0
        %1518 = vmatmul.mubr.bf16.gmra.mrb[0].mxu0 %v1480
        %v1519 = vpop.f32.mrb[0].mxu0
        %v1520 = vadd.f32 0.0, %v1519
        %v1521 = vpop.f32.mrb[0].mxu0
        %v1522 = vpop.f32.mrb[0].mxu0
        %v1523 = vpop.f32.mrb[0].mxu0
        %1524 = vdwg.mxu0
        %v1525 = vpack.c.bf16 %v1520, %v1520
        %v1527 = vsel %vm912, %v1525, 0
        %v1530 = vsel %vm976, %v707, 0
        %1532 = vmatprep.subr.bf16.mxu0 0
        %1533 = vmatpush1.bf16.msra.mxu0 %v1530
        %1534 = vmatprep.subr.bf16.mxu0 0
        %1535 = vmatpush1.bf16.msra.mxu0 0
        %1536 = vmatprep.subr.bf16.mxu0 0
        %1537 = vmatpush1.bf16.msra.mxu0 0
        %1538 = vmatprep.subr.bf16.mxu0 0
        %1539 = vmatpush1.bf16.msra.mxu0 0
        %1540 = vmatprep.subr.bf16.mxu0 0
        %1541 = vmatpush1.bf16.msra.mxu0 0
        %1542 = vmatprep.subr.bf16.mxu0 0
        %1543 = vmatpush1.bf16.msra.mxu0 0
        %1544 = vmatprep.subr.bf16.mxu0 0
        %1545 = vmatpush1.bf16.msra.mxu0 0
        %1546 = vmatprep.subr.bf16.mxu0 0
        %1547 = vmatpush1.bf16.msra.mxu0 0
        %1548 = vmatprep.subr.bf16.mxu0 0
        %1549 = vmatpush1.bf16.msra.mxu0 0
        %1550 = vmatprep.subr.bf16.mxu0 0
        %1551 = vmatpush1.bf16.msra.mxu0 0
        %1552 = vmatprep.subr.bf16.mxu0 0
        %1553 = vmatpush1.bf16.msra.mxu0 0
        %1554 = vmatprep.subr.bf16.mxu0 0
        %1555 = vmatpush1.bf16.msra.mxu0 0
        %1556 = vmatprep.subr.bf16.mxu0 0
        %1557 = vmatpush1.bf16.msra.mxu0 0
        %1558 = vmatprep.subr.bf16.mxu0 0
        %1559 = vmatpush1.bf16.msra.mxu0 0
        %1560 = vmatprep.subr.bf16.mxu0 0
        %1561 = vmatpush1.bf16.msra.mxu0 0
        %1562 = vmatprep.subr.bf16.mxu0 0
        %1563 = vmatpush1.bf16.msra.mxu0 0
        %1564 = vmatprep.mubr.bf16.mxu0 0
        %1565 = vmatmul.mubr.bf16.gmra.mrb[0].mxu0 %v1527
        %v1566 = vpop.f32.mrb[0].mxu0
        %v1567 = vadd.f32 0.0, %v1566
        %v1568 = vpop.f32.mrb[0].mxu0
        %v1569 = vpop.f32.mrb[0].mxu0
        %v1570 = vpop.f32.mrb[0].mxu0
        %1571 = vdwg.mxu0
        %v1572 = vadd.f32 %v1402, %v1567
        %1573 = vrot.lane.b32.xlu0 %v834, 104
        %v1574 = vpop.permute.xlu0 %1573
        %s1576 = scalar_lea.vmem %s670, 24 [#allocation4]
        %1577 = vst.msk [vmem:[%s1576] sm:$0xff] %vm912, %v1574
        %1578 = vrot.lane.b32.xlu0 %v896, 104
        %v1579 = vpop.permute.xlu0 %1578
        %s1581 = scalar_lea.vmem %s677, 24 [#allocation6]
        %1582 = vst.msk [vmem:[%s1581] sm:$0xff] %vm912, %v1579
        %v1584 = vlaneseq
        %v1585 = vshrl.u32 %v1584, 7
        %v1586 = vsub.s32 0, %v1585
        %v1587 = vrot.slane %v697, %v1586
        %v1589 = vadd.f32 %v1572, %v1587
        %v1590 = vadd.f32 %v690, %v1589
        %v1591 = vsel %vm730, %v1590, 0.0
        %1592 = vadd.xlane.f32.xlu0 %v1591
        %v1593 = vpop.xlane.xlu0 %1592
        %v1594 = vrcp.pop 32.0
        %v1595 = vmul.f32 %v1593, %v1594
        %v1596 = vsub.f32 %v1590, %v1595
        %v1597 = vmul.f32 %v1596, %v1596
        %v1598 = vsel %vm730, %v1597, 0.0
        %1599 = vadd.xlane.f32.xlu0 %v1598
        %v1600 = vpop.xlane.xlu0 %1599
        %v1601 = vmul.f32 %v1600, %v1594
        %v1602 = vadd.f32 %v1601, 1e-05
        %v1603 = vrsqrt.pop %v1602
        %v1604 = vmul.f32 %v1596, %v1603
        %v1606 = vlaneseq
        %v1607 = vshrl.u32 %v1606, 7
        %v1608 = vsub.s32 0, %v1607
        %v1609 = vrot.slane %v700, %v1608
        %v1611 = vmul.f32 %v1604, %v1609
        %v1613 = vlaneseq
        %v1614 = vshrl.u32 %v1613, 7
        %v1615 = vsub.s32 0, %v1614
        %v1616 = vrot.slane %v701, %v1615
        %v1618 = vadd.f32 %v1611, %v1616
        %v1619 = vpack.c.bf16 %v1618, %v1618
        %v1620 = vld [vmem:[%s10] sm:$0xf]
        %v1621 = vld [vmem:[%s10 + $0x4] sm:$0xf]
        %v1622 = vld [vmem:[%s10 + $0x8] sm:$0xf]
        %v1623 = vld [vmem:[%s10 + $0xc] sm:$0xf]
        %v1625 = vlaneseq
        %v1626 = vshrl.u32 %v1625, 7
        %v1627 = vsub.s32 0, %v1626
        %v1628 = vrot.slane %v698, %v1627
        %v1634 = vunpack.c.l.b16 %v1620
        %v1635 = vunpack.c.l.b16 %v1621
        %v1636 = vunpack.c.l.b16 %v1622
        %v1637 = vunpack.c.l.b16 %v1623
        %v1638 = vpack.c.b16 %v1635, %v1634
        %v1639 = vpack.c.b16 %v1637, %v1636
        %v1643 = vsel %vm730, %v1619, 0
        %1645 = vmatprep.subr.bf16.mxu0 0
        %1646 = vmatpush1.bf16.msra.mxu0 %v1638
        %1647 = vmatprep.subr.bf16.mxu0 0
        %1648 = vmatpush1.bf16.msra.mxu0 %v1639
        %1649 = vmatprep.subr.bf16.mxu0 0
        %1650 = vmatpush1.bf16.msra.mxu0 0
        %1651 = vmatprep.subr.bf16.mxu0 0
        %1652 = vmatpush1.bf16.msra.mxu0 0
        %1653 = vmatprep.subr.bf16.mxu0 0
        %1654 = vmatpush1.bf16.msra.mxu0 0
        %1655 = vmatprep.subr.bf16.mxu0 0
        %1656 = vmatpush1.bf16.msra.mxu0 0
        %1657 = vmatprep.subr.bf16.mxu0 0
        %1658 = vmatpush1.bf16.msra.mxu0 0
        %1659 = vmatprep.subr.bf16.mxu0 0
        %1660 = vmatpush1.bf16.msra.mxu0 0
        %1661 = vmatprep.subr.bf16.mxu0 0
        %1662 = vmatpush1.bf16.msra.mxu0 0
        %1663 = vmatprep.subr.bf16.mxu0 0
        %1664 = vmatpush1.bf16.msra.mxu0 0
        %1665 = vmatprep.subr.bf16.mxu0 0
        %1666 = vmatpush1.bf16.msra.mxu0 0
        %1667 = vmatprep.subr.bf16.mxu0 0
        %1668 = vmatpush1.bf16.msra.mxu0 0
        %1669 = vmatprep.subr.bf16.mxu0 0
        %1670 = vmatpush1.bf16.msra.mxu0 0
        %1671 = vmatprep.subr.bf16.mxu0 0
        %1672 = vmatpush1.bf16.msra.mxu0 0
        %1673 = vmatprep.subr.bf16.mxu0 0
        %1674 = vmatpush1.bf16.msra.mxu0 0
        %1675 = vmatprep.subr.bf16.mxu0 0
        %1676 = vmatpush1.bf16.msra.mxu0 0
        %1677 = vmatprep.mubr.bf16.mxu0 0
        %1678 = vmatmul.mubr.bf16.gmra.mrb[0].mxu0 %v1643
        %v1679 = vpop.f32.mrb[0].mxu0
        %v1680 = vadd.f32 %v1628, %v1679
        %v1681 = vpop.f32.mrb[0].mxu0
        %v1682 = vpop.f32.mrb[0].mxu0
        %v1683 = vpop.f32.mrb[0].mxu0
        %1684 = vdwg.mxu0
        %v1685 = vmul.f32 %v1680, 0.5
        %v1686 = vmul.f32 %v1680, 0.044715
        %v1687 = vmul.f32 %v1686, %v1680
        %v1688 = vmul.f32 %v1687, %v1680
        %v1689 = vadd.f32 %v1680, %v1688
        %v1690 = vmul.f32 %v1689, 0.7978846
        %v1691 = vtanh.pop %v1690
        %v1692 = vadd.f32 %v1691, 1.0
        %v1693 = vmul.f32 %v1685, %v1692
        %v1694 = vpack.c.bf16 %v1693, %v1693
        %v1695 = vld [vmem:[%s12] sm:$0xf]
        %v1696 = vld [vmem:[%s12 + $0x4] sm:$0xf]
        %v1697 = vld [vmem:[%s12 + $0x8] sm:$0xf]
        %v1698 = vld [vmem:[%s12 + $0xc] sm:$0xf]
        %v1699 = vld [vmem:[%s12 + $0x10] sm:$0xf]
        %v1700 = vld [vmem:[%s12 + $0x14] sm:$0xf]
        %v1701 = vld [vmem:[%s12 + $0x18] sm:$0xf]
        %v1702 = vld [vmem:[%s12 + $0x1c] sm:$0xf]
        %v1704 = vlaneseq
        %v1705 = vshrl.u32 %v1704, 7
        %v1706 = vsub.s32 0, %v1705
        %v1707 = vrot.slane %v699, %v1706
        %v1717 = vunpack.c.l.b16 %v1695
        %v1718 = vunpack.c.l.b16 %v1696
        %v1719 = vunpack.c.l.b16 %v1697
        %v1720 = vunpack.c.l.b16 %v1698
        %v1721 = vunpack.c.l.b16 %v1699
        %v1722 = vunpack.c.l.b16 %v1700
        %v1723 = vunpack.c.l.b16 %v1701
        %v1724 = vunpack.c.l.b16 %v1702
        %v1725 = vpack.c.b16 %v1718, %v1717
        %v1726 = vpack.c.b16 %v1720, %v1719
        %v1727 = vpack.c.b16 %v1722, %v1721
        %v1728 = vpack.c.b16 %v1724, %v1723
        %vm1733 = vcmask 523264
        %v1735 = vsel %vm1733, %v1694, 0
        %1737 = vmatprep.subr.bf16.mxu0 0
        %1738 = vmatpush1.bf16.msra.mxu0 %v1725
        %1739 = vmatprep.subr.bf16.mxu0 0
        %1740 = vmatpush1.bf16.msra.mxu0 %v1726
        %1741 = vmatprep.subr.bf16.mxu0 0
        %1742 = vmatpush1.bf16.msra.mxu0 %v1727
        %1743 = vmatprep.subr.bf16.mxu0 0
        %1744 = vmatpush1.bf16.msra.mxu0 %v1728
        %1745 = vmatprep.subr.bf16.mxu0 0
        %1746 = vmatpush1.bf16.msra.mxu0 0
        %1747 = vmatprep.subr.bf16.mxu0 0
        %1748 = vmatpush1.bf16.msra.mxu0 0
        %1749 = vmatprep.subr.bf16.mxu0 0
        %1750 = vmatpush1.bf16.msra.mxu0 0
        %1751 = vmatprep.subr.bf16.mxu0 0
        %1752 = vmatpush1.bf16.msra.mxu0 0
        %1753 = vmatprep.subr.bf16.mxu0 0
        %1754 = vmatpush1.bf16.msra.mxu0 0
        %1755 = vmatprep.subr.bf16.mxu0 0
        %1756 = vmatpush1.bf16.msra.mxu0 0
        %1757 = vmatprep.subr.bf16.mxu0 0
        %1758 = vmatpush1.bf16.msra.mxu0 0
        %1759 = vmatprep.subr.bf16.mxu0 0
        %1760 = vmatpush1.bf16.msra.mxu0 0
        %1761 = vmatprep.subr.bf16.mxu0 0
        %1762 = vmatpush1.bf16.msra.mxu0 0
        %1763 = vmatprep.subr.bf16.mxu0 0
        %1764 = vmatpush1.bf16.msra.mxu0 0
        %1765 = vmatprep.subr.bf16.mxu0 0
        %1766 = vmatpush1.bf16.msra.mxu0 0
        %1767 = vmatprep.subr.bf16.mxu0 0
        %1768 = vmatpush1.bf16.msra.mxu0 0
        %1769 = vmatprep.mubr.bf16.mxu0 0
        %1770 = vmatmul.mubr.bf16.gmra.mrb[0].mxu0 %v1735
        %v1771 = vpop.f32.mrb[0].mxu0
        %v1772 = vadd.f32 %v1707, %v1771
        %v1773 = vpop.f32.mrb[0].mxu0
        %v1774 = vpop.f32.mrb[0].mxu0
        %v1775 = vpop.f32.mrb[0].mxu0
        %1776 = vdwg.mxu0
        %v1777 = vadd.f32 %v1618, %v1772
        %v1778 = vsel %vm730, %v1777, 0.0
        %1779 = vadd.xlane.f32.xlu0 %v1778
        %v1780 = vpop.xlane.xlu0 %1779
        %v1781 = vmul.f32 %v1780, %v1594
        %v1782 = vsub.f32 %v1777, %v1781
        %v1783 = vmul.f32 %v1782, %v1782
        %v1784 = vsel %vm730, %v1783, 0.0
        %1785 = vadd.xlane.f32.xlu0 %v1784
        %v1786 = vpop.xlane.xlu0 %1785
        %v1787 = vmul.f32 %v1786, %v1594
        %v1788 = vadd.f32 %v1787, 1e-05
        %v1789 = vrsqrt.pop %v1788
        %v1790 = vmul.f32 %v1782, %v1789
        %v1792 = vlaneseq
        %v1793 = vshrl.u32 %v1792, 7
        %v1794 = vsub.s32 0, %v1793
        %v1795 = vrot.slane %v702, %v1794
        %v1797 = vmul.f32 %v1790, %v1795
        %v1799 = vlaneseq
        %v1800 = vshrl.u32 %v1799, 7
        %v1801 = vsub.s32 0, %v1800
        %v1802 = vrot.slane %v703, %v1801
        %v1804 = vadd.f32 %v1797, %v1802
        %1805 = vst.msk [vmem:[%s663] sm:$0xff] %vm730, %v1804
        %s1806 = sand.u32 %s450, 1
        %s1807 = scalar_lea.sflag [#allocation3], %s1806
        %s1808 = sand.u32 %s450, 1
        %s1809 = smul.addr %s1808, 8
        %s1810 = scalar_lea.vmem [#allocation2], %s1809
        %s1811 = sand.u32 %s38, 1
        %s1812 = scalar_lea.sflag [#allocation5], %s1811
        %s1813 = sand.u32 %s478, 1
        %s1814 = smul.addr %s1813, 32
        %s1815 = scalar_lea.vmem [#allocation4], %s1814
        %s1816 = sand.u32 %s38, 1
        %s1817 = scalar_lea.sflag [#allocation5], %s1816
        %s1818 = sand.u32 %s506, 1
        %s1819 = smul.addr %s1818, 32
        %s1820 = scalar_lea.vmem [#allocation6], %s1819
        // Predicated region
        $region93: #{gpt_layer.1} parent=91 // pred_check
          %p1821 = pneg %p460
        $region94: #{gpt_layer.1} parent=91 // pred_check_branch
          %1823 = sbr.rel (%p1821) target = $region96
        $region95: #{gpt_layer.1} parent=91 // pred_region
          %s1825 = ssub.s32 128, 128
          %1826 = vsyncadd %s1807, %s1825
          %s1827 = sadd.s32 %s43, %s42
          %s1828 = smul.addr %s1827, 128
          %s1829 = scalar_lea.hbm %s18, %s1828
          %s1831 = sshll.u32 %s1810, 4
          %s1832 = int_to_ptr.vmem [resolvable:$true] %s1831
          %1834 = dma.vmem_to_hbm [thread:$0]  %s1832, 128, %s1829, %s1807
        $region96: #{gpt_layer.1} parent=91 // pred_fallthru
          _
        // Predicated region
        $region97: #{gpt_layer.1} parent=91 // pred_check
          %p1835 = pneg %p488
        $region98: #{gpt_layer.1} parent=91 // pred_check_branch
          %1837 = sbr.rel (%p1835) target = $region100
        $region99: #{gpt_layer.1} parent=91 // pred_region
          %s1839 = ssub.s32 512, 512
          %1840 = vsyncadd %s1812, %s1839
          %s1841 = smul.addr %s42, 4
          %s1842 = sadd.s32 %s43, %s1841
          %s1843 = smul.addr %s1842, 128
          %s1844 = scalar_lea.hbm %s19, %s1843
          %s1845 = sshll.u32 %s1815, 4
          %s1846 = int_to_ptr.vmem [resolvable:$true] %s1845
          %1851 = dma.vmem_to_hbm [thread:$0]  %s1846, 512, %s1844, %s1812, 128, 128, 8
        $region100: #{gpt_layer.1} parent=91 // pred_fallthru
          _
        // Predicated region
        $region101: #{gpt_layer.1} parent=91 // pred_check
          %p1852 = pneg %p516
        $region102: #{gpt_layer.1} parent=91 // pred_check_branch
          %1854 = sbr.rel (%p1852) target = $region104
        $region103: #{gpt_layer.1} parent=91 // pred_region
          %s1856 = ssub.s32 512, 512
          %1857 = vsyncadd %s1817, %s1856
          %s1858 = smul.addr %s42, 4
          %s1859 = sadd.s32 %s43, %s1858
          %s1860 = smul.addr %s1859, 128
          %s1861 = scalar_lea.hbm %s20, %s1860
          %s1862 = sshll.u32 %s1820, 4
          %s1863 = int_to_ptr.vmem [resolvable:$true] %s1862
          %1868 = dma.vmem_to_hbm [thread:$0]  %s1863, 512, %s1861, %s1817, 128, 128, 8
        $region104: #{gpt_layer.1} parent=91 // pred_fallthru
          _
      $region92: #{gpt_layer.1} parent=5 // pred_fallthru
        _
      %p1869 = scmp.le.s32.totalorder 2, %s33
      // Predicated region
      $region105: #{gpt_layer.1} parent=5 // pred_check
        %p1870 = pneg %p1869
      $region106: #{gpt_layer.1} parent=5 // pred_check_branch
        %1872 = sbr.rel (%p1870) target = $region108
      $region107: #{gpt_layer.1} parent=5 // pred_region
        %s1873 = ssub.s32 %s33, 2
        // Predicated region
        $region109: #{gpt_layer.1} parent=107 // pred_check
          %p1874 = pneg %p466
        $region110: #{gpt_layer.1} parent=107 // pred_check_branch
          %1876 = sbr.rel (%p1874) target = $region112
        $region111: #{gpt_layer.1} parent=107 // pred_region
          %s1877 = sand.u32 %s451, 1
          %s1878 = scalar_lea.sflag [#allocation3], %s1877
          %s1879 = sand.u32 %s451, 1
          %s1880 = smul.addr %s1879, 8
          %s1881 = scalar_lea.vmem [#allocation2], %s1880
          %1882 = dma.done %s1878, 128
        $region112: #{gpt_layer.1} parent=107 // pred_fallthru
          _
        // Predicated region
        $region113: #{gpt_layer.1} parent=107 // pred_check
          %p1883 = pneg %p494
        $region114: #{gpt_layer.1} parent=107 // pred_check_branch
          %1885 = sbr.rel (%p1883) target = $region116
        $region115: #{gpt_layer.1} parent=107 // pred_region
          %s1886 = sand.u32 %s39, 1
          %s1887 = scalar_lea.sflag [#allocation5], %s1886
          %s1888 = sand.u32 %s479, 1
          %s1889 = smul.addr %s1888, 32
          %s1890 = scalar_lea.vmem [#allocation4], %s1889
          %1891 = dma.done %s1887, 512
        $region116: #{gpt_layer.1} parent=107 // pred_fallthru
          _
        // Predicated region
        $region117: #{gpt_layer.1} parent=107 // pred_check
          %p1892 = pneg %p522
        $region118: #{gpt_layer.1} parent=107 // pred_check_branch
          %1894 = sbr.rel (%p1892) target = $region120
        $region119: #{gpt_layer.1} parent=107 // pred_region
          %s1895 = sand.u32 %s39, 1
          %s1896 = scalar_lea.sflag [#allocation5], %s1895
          %s1897 = sand.u32 %s507, 1
          %s1898 = smul.addr %s1897, 32
          %s1899 = scalar_lea.vmem [#allocation6], %s1898
          %1900 = dma.done %s1896, 512
        $region120: #{gpt_layer.1} parent=107 // pred_fallthru
          _
      $region108: #{gpt_layer.1} parent=5 // pred_fallthru
        _
    $region6: #{gpt_layer.1} parent=1 // loop_footer
      %s37 = sadd.s32 1, %s33
    $region7: #{gpt_layer.1} parent=1 // loop_footer_branch
      %32 = sbr.rel target = $region3
    $region8: #{gpt_layer.1} parent=1 // loop_exit
      _
    %1901 = vsyncpa [#allocation3], 1
    %s1902 = scalar_lea.sflag [#allocation3], 1
    %1903 = vsyncpa %s1902, 1
    %1904 = vsyncpa [#allocation5], 1
    %s1905 = scalar_lea.sflag [#allocation5], 1
    %1906 = vsyncpa %s1905, 1

</llo_original>
